<compile_context>
chip_gen: v7x
topology: tpu7x:2x2x1
jax: 0.10.0
libtpu: 0.0.40
codegen_flags: <defaults>
</compile_context>

<pallas_src>
import jax
import jax.numpy as jnp
from jax.experimental import pallas as pl
from jax.experimental.pallas import tpu as pltpu

_LANE = 128          # vreg lane width (last dim)
_BF16_SUBLANE = 16   # bf16 packs 16 rows per vreg (second-to-last dim)


def _round_up(x: int, m: int) -> int:
    return (x + m - 1) // m * m


def _pad2d(a, rows: int, cols: int):
    return jnp.pad(a, ((0, rows - a.shape[0]), (0, cols - a.shape[1])))


def _make_policy_kernel(n_layers: int):
    """Ref order: obs, (W_i, b_i) * n_layers, W_out, b_out, logstd, eps, out."""

    def kernel(obs_ref, *refs):
        # ---- mean_net: n_layers x (Linear + Tanh), then Linear ---------------------
        h = obs_ref[...]                                    # bf16 [tm, ob_p]
        idx = 0
        for _ in range(n_layers):
            w = refs[idx][...]                              # bf16 [in_p, out_p]
            b = refs[idx + 1][...]                          # f32  [1, out_p]
            idx += 2
            z = jnp.dot(h, w, preferred_element_type=jnp.float32) + b   # MXU, f32 acc
            h = jnp.tanh(z).astype(jnp.bfloat16)            # tanh/bias in f32; bf16 for MXU

        w_out = refs[idx][...]
        b_out = refs[idx + 1][...]
        logstd = refs[idx + 2][...]                         # f32 [1, ac_p]
        eps = refs[idx + 3][...]                            # f32 [tm, ac_p]
        out_ref = refs[idx + 4]

        mean = jnp.dot(h, w_out, preferred_element_type=jnp.float32) + b_out

        # ---- rsample: mean + exp(logstd) * eps (diagonal scale_tril) ---------------
        # Lane-dense store: last dim of the block is a multiple of 128.
        out_ref[...] = (mean + jnp.exp(logstd) * eps).astype(out_ref.dtype)

    return kernel


def prepare_policy_params(params, logstd):
    """Pad feature dims to lane multiples and cast matmul operands to bf16 ONCE.

    Hoisted out of the forward hot path (per performance review): the per-call
    jnp.pad + astype on every parameter was rivaling the kernel itself.
    """
    ob_dim = params[0][0].shape[0]
    ac_dim = params[-1][0].shape[1]
    ob_p = _round_up(ob_dim, _LANE)
    ac_p = _round_up(ac_dim, _LANE)

    params_pad = []
    in_p = ob_p
    for w, b in params:
        out_p = _round_up(w.shape[1], _LANE)
        params_pad.append((_pad2d(w, in_p, out_p).astype(jnp.bfloat16),
                           _pad2d(b, 1, out_p).astype(jnp.float32)))
        in_p = out_p
    logstd_pad = _pad2d(logstd, 1, ac_p).astype(jnp.float32)

    return {
        "params_pad": params_pad,
        "logstd_pad": logstd_pad,
        "ob_dim": ob_dim,
        "ac_dim": ac_dim,
        "ob_p": ob_p,
        "ac_p": ac_p,
        "n_layers": len(params) - 1,
    }


def _vmem_budget_bytes(params_pad, logstd_pad, tm, ob_p, ac_p):
    """Scoped-VMEM budget from actual buffer sizes (portable across generations)."""
    # Single-buffered resident parameters (pl.Buffered(1)).
    param_bytes = sum(int(w.size) * w.dtype.itemsize + int(b.size) * b.dtype.itemsize
                      for w, b in params_pad)
    param_bytes += int(logstd_pad.size) * logstd_pad.dtype.itemsize
    # Double-buffered streaming tiles: obs (bf16), eps (f32), out (f32).
    stream_bytes = 2 * (tm * ob_p * 2 + tm * ac_p * 4 + tm * ac_p * 4)
    # Elementwise / activation temporaries at the widest padded layer width.
    widest = max([ob_p, ac_p] + [int(w.shape[1]) for w, _ in params_pad])
    temp_bytes = 4 * tm * widest * 4
    budget = param_bytes + stream_bytes + temp_bytes + (4 << 20)   # headroom
    # Clamp: >=16 MiB (cheap), <=48 MiB (safe under v7x's 64 MiB physical VMEM).
    return int(min(max(budget, 16 << 20), 48 << 20))


def mlp_policy_forward(obs, prepared, key, *, max_batch_tile=512):
    """Pallas-backed MLPPolicySL.forward().

    obs:      [N, ob_dim] float32
    prepared: output of prepare_policy_params(params, logstd)
    key:      jax PRNG key for the reparameterization noise
    returns actions: [N, ac_dim] float32
    """
    n, ob_dim = obs.shape
    assert ob_dim == prepared["ob_dim"]
    ob_p, ac_p, ac_dim = prepared["ob_p"], prepared["ac_p"], prepared["ac_dim"]
    params_pad, logstd_pad = prepared["params_pad"], prepared["logstd_pad"]
    n_layers = prepared["n_layers"]

    # ---- batch tiling ----------------------------------------------------------------
    # Prefer one big tile for small batches (no forced split: grid is a serial loop on
    # v5e/v6e); large batches naturally yield multiple "parallel" grid steps, which v7x
    # shards across its two TensorCores.  Tiles are multiples of 16 rows (bf16 packing).
    tm = min(max_batch_tile, _round_up(n, _BF16_SUBLANE))
    n_pad = _round_up(n, tm)
    grid = (n_pad // tm,)

    # ---- per-call inputs: padded obs (bf16) and wrapper-generated gaussian noise ------
    obs_pad = _pad2d(obs, n_pad, ob_p).astype(jnp.bfloat16)
    eps = jax.random.normal(key, (n_pad, ac_p), dtype=jnp.float32)

    # ---- specs -------------------------------------------------------------------------
    in_specs = [pl.BlockSpec((tm, ob_p), lambda i: (i, 0))]          # obs: tiled over batch
    for w_p, b_p in params_pad:
        # Constant index_map + single buffer: each parameter is DMA'd once and the
        # never-used second pipeline buffer is not allocated.
        in_specs.append(pl.BlockSpec(w_p.shape, lambda i: (0, 0),
                                     pipeline_mode=pl.Buffered(1)))
        in_specs.append(pl.BlockSpec(b_p.shape, lambda i: (0, 0),
                                     pipeline_mode=pl.Buffered(1)))
    in_specs.append(pl.BlockSpec(logstd_pad.shape, lambda i: (0, 0),
                                 pipeline_mode=pl.Buffered(1)))
    in_specs.append(pl.BlockSpec((tm, ac_p), lambda i: (i, 0)))      # eps: tiled over batch
    out_spec = pl.BlockSpec((tm, ac_p), lambda i: (i, 0))            # lane-dense output

    flat_inputs = [obs_pad]
    for w_p, b_p in params_pad:
        flat_inputs += [w_p, b_p]
    flat_inputs += [logstd_pad, eps]

    kernel = _make_policy_kernel(n_layers)

    out = pl.pallas_call(
        kernel,
        out_shape=jax.ShapeDtypeStruct((n_pad, ac_p), jnp.float32),
        grid_spec=pltpu.PrefetchScalarGridSpec(
            num_scalar_prefetch=0,
            grid=grid,
            in_specs=in_specs,
            out_specs=out_spec,
        ),
        compiler_params=pltpu.CompilerParams(
            dimension_semantics=("parallel",),
            vmem_limit_bytes=_vmem_budget_bytes(params_pad, logstd_pad, tm, ob_p, ac_p),
        ),
    )(*flat_inputs)

    return out[:n, :ac_dim]


def init_mlp_params(key, ob_dim, ac_dim, n_layers, hidden_size):
    """Init matching PyTorch nn.Linear defaults; weights stored as [in, out]."""
    params = []
    dims = [(ob_dim, hidden_size)]
    for _ in range(n_layers - 1):
        dims.append((hidden_size, hidden_size))
    dims.append((hidden_size, ac_dim))
    for fan_in, fan_out in dims:
        key, kw, kb = jax.random.split(key, 3)
        bound = 1.0 / jnp.sqrt(fan_in)
        w = jax.random.uniform(kw, (fan_in, fan_out), jnp.float32, -bound, bound)
        b = jax.random.uniform(kb, (1, fan_out), jnp.float32, -bound, bound)
        params.append((w, b))
    return params


def reference_mean(obs, params):
    """Pure-JAX mean_net with the same bf16-matmul / f32-accumulate math as the kernel."""
    h = obs.astype(jnp.bfloat16)
    for w, b in params[:-1]:
        z = jnp.dot(h, w.astype(jnp.bfloat16), preferred_element_type=jnp.float32) + b
        h = jnp.tanh(z).astype(jnp.bfloat16)
    w, b = params[-1]
    return jnp.dot(h, w.astype(jnp.bfloat16), preferred_element_type=jnp.float32) + b


if __name__ == "__main__":
    # Small shapes consistent with the module: observations [N, ob_dim] -> actions [N, ac_dim].
    N, OB_DIM, AC_DIM, N_LAYERS, HIDDEN = 384, 16, 8, 2, 32

    key = jax.random.PRNGKey(0)
    k_obs, k_params, k_eps1, k_eps2 = jax.random.split(key, 4)

    obs = jax.random.normal(k_obs, (N, OB_DIM), dtype=jnp.float32)
    params = init_mlp_params(k_params, OB_DIM, AC_DIM, N_LAYERS, HIDDEN)

    mean_ref = reference_mean(obs, params)

    # (1) Deterministic check of the mean_net path: std = exp(-30) ~ 1e-13, so the
    #     reparameterization noise is numerically invisible and output must equal the mean.
    logstd_tiny = jnp.full((1, AC_DIM), -30.0, dtype=jnp.float32)
    prepared_tiny = prepare_policy_params(params, logstd_tiny)     # padding hoisted out of forward
    act_det = jax.block_until_ready(mlp_policy_forward(obs, prepared_tiny, k_eps1))
    assert act_det.shape == (N, AC_DIM)
    max_err = float(jnp.max(jnp.abs(act_det - mean_ref)))
    assert jnp.allclose(act_det, mean_ref, atol=2e-3, rtol=2e-3), max_err

    # (2) Stochastic check of rsample: with logstd = 0 the residual actions - mean
    #     should be ~N(0, 1) (3072 samples -> wide margins).
    logstd_zero = jnp.zeros((1, AC_DIM), dtype=jnp.float32)  # nn.Parameter(torch.zeros(ac_dim))
    prepared_zero = prepare_policy_params(params, logstd_zero)
    act = jax.block_until_ready(mlp_policy_forward(obs, prepared_zero, k_eps2))
    assert act.shape == (N, AC_DIM)
    assert bool(jnp.all(jnp.isfinite(act)))
    resid = act - mean_ref
    assert abs(float(jnp.mean(resid))) < 0.15
    assert 0.85 < float(jnp.std(resid)) < 1.15

    print("KERNEL_OK")
</pallas_src>

<mosaic_0001>
module attributes {stable_mosaic.version = 11 : i64} {
  func.func @kernel(%arg0: i32, %arg1: memref<384x128xbf16, #tpu.memory_space<vmem>>, %arg2: memref<128x128xbf16, #tpu.memory_space<vmem>>, %arg3: memref<1x128xf32, #tpu.memory_space<vmem>>, %arg4: memref<128x128xbf16, #tpu.memory_space<vmem>>, %arg5: memref<1x128xf32, #tpu.memory_space<vmem>>, %arg6: memref<128x128xbf16, #tpu.memory_space<vmem>>, %arg7: memref<1x128xf32, #tpu.memory_space<vmem>>, %arg8: memref<1x128xf32, #tpu.memory_space<vmem>>, %arg9: memref<384x128xf32, #tpu.memory_space<vmem>>, %arg10: memref<384x128xf32, #tpu.memory_space<vmem>>) attributes {dimension_semantics = [#tpu.dimension_semantics<parallel>], iteration_bounds = array<i64: 1>, scalar_prefetch = 0 : i64, scratch_operands = 0 : i64, tpu.core_type = #tpu.core_type<tc>, window_params = [{transform_indices = @transform_0, window_bounds = array<i64: 384, 128>}, {pipeline_mode = #tpu.pipeline_mode<synchronous>, transform_indices = @transform_1, window_bounds = array<i64: 128, 128>}, {pipeline_mode = #tpu.pipeline_mode<synchronous>, transform_indices = @transform_2, window_bounds = array<i64: 1, 128>}, {pipeline_mode = #tpu.pipeline_mode<synchronous>, transform_indices = @transform_3, window_bounds = array<i64: 128, 128>}, {pipeline_mode = #tpu.pipeline_mode<synchronous>, transform_indices = @transform_4, window_bounds = array<i64: 1, 128>}, {pipeline_mode = #tpu.pipeline_mode<synchronous>, transform_indices = @transform_5, window_bounds = array<i64: 128, 128>}, {pipeline_mode = #tpu.pipeline_mode<synchronous>, transform_indices = @transform_6, window_bounds = array<i64: 1, 128>}, {pipeline_mode = #tpu.pipeline_mode<synchronous>, transform_indices = @transform_7, window_bounds = array<i64: 1, 128>}, {transform_indices = @transform_8, window_bounds = array<i64: 384, 128>}, {transform_indices = @transform_9, window_bounds = array<i64: 384, 128>}]} {
    %c0 = arith.constant 0 : index
    %c0_0 = arith.constant 0 : index
    %0 = vector.load %arg1[%c0, %c0_0] : memref<384x128xbf16, #tpu.memory_space<vmem>>, vector<384x128xbf16>
    %c0_1 = arith.constant 0 : index
    %c0_2 = arith.constant 0 : index
    %1 = vector.load %arg2[%c0_1, %c0_2] : memref<128x128xbf16, #tpu.memory_space<vmem>>, vector<128x128xbf16>
    %c0_3 = arith.constant 0 : index
    %c0_4 = arith.constant 0 : index
    %2 = vector.load %arg3[%c0_3, %c0_4] : memref<1x128xf32, #tpu.memory_space<vmem>>, vector<1x128xf32>
    %cst = arith.constant dense<0.000000e+00> : vector<384x128xf32>
    %3 = tpu.matmul %0, %1, %cst {dimension_numbers = #tpu.dot_dimension_numbers<[1], [0], [0], [1], [0, 0, 1, 1], [], []>} : vector<384x128xbf16>, vector<128x128xbf16>, vector<384x128xf32> -> vector<384x128xf32>
    %4 = vector.broadcast %2 : vector<1x128xf32> to vector<384x128xf32>
    %5 = arith.addf %3, %4 : vector<384x128xf32>
    %6 = math.tanh %5 : vector<384x128xf32>
    %7 = arith.truncf %6 : vector<384x128xf32> to vector<384x128xbf16>
    %c0_5 = arith.constant 0 : index
    %c0_6 = arith.constant 0 : index
    %8 = vector.load %arg4[%c0_5, %c0_6] : memref<128x128xbf16, #tpu.memory_space<vmem>>, vector<128x128xbf16>
    %c0_7 = arith.constant 0 : index
    %c0_8 = arith.constant 0 : index
    %9 = vector.load %arg5[%c0_7, %c0_8] : memref<1x128xf32, #tpu.memory_space<vmem>>, vector<1x128xf32>
    %cst_9 = arith.constant dense<0.000000e+00> : vector<384x128xf32>
    %10 = tpu.matmul %7, %8, %cst_9 {dimension_numbers = #tpu.dot_dimension_numbers<[1], [0], [0], [1], [0, 0, 1, 1], [], []>} : vector<384x128xbf16>, vector<128x128xbf16>, vector<384x128xf32> -> vector<384x128xf32>
    %11 = vector.broadcast %9 : vector<1x128xf32> to vector<384x128xf32>
    %12 = arith.addf %10, %11 : vector<384x128xf32>
    %13 = math.tanh %12 : vector<384x128xf32>
    %14 = arith.truncf %13 : vector<384x128xf32> to vector<384x128xbf16>
    %c0_10 = arith.constant 0 : index
    %c0_11 = arith.constant 0 : index
    %15 = vector.load %arg6[%c0_10, %c0_11] : memref<128x128xbf16, #tpu.memory_space<vmem>>, vector<128x128xbf16>
    %c0_12 = arith.constant 0 : index
    %c0_13 = arith.constant 0 : index
    %16 = vector.load %arg7[%c0_12, %c0_13] : memref<1x128xf32, #tpu.memory_space<vmem>>, vector<1x128xf32>
    %c0_14 = arith.constant 0 : index
    %c0_15 = arith.constant 0 : index
    %17 = vector.load %arg8[%c0_14, %c0_15] : memref<1x128xf32, #tpu.memory_space<vmem>>, vector<1x128xf32>
    %c0_16 = arith.constant 0 : index
    %c0_17 = arith.constant 0 : index
    %18 = vector.load %arg9[%c0_16, %c0_17] : memref<384x128xf32, #tpu.memory_space<vmem>>, vector<384x128xf32>
    %cst_18 = arith.constant dense<0.000000e+00> : vector<384x128xf32>
    %19 = tpu.matmul %14, %15, %cst_18 {dimension_numbers = #tpu.dot_dimension_numbers<[1], [0], [0], [1], [0, 0, 1, 1], [], []>} : vector<384x128xbf16>, vector<128x128xbf16>, vector<384x128xf32> -> vector<384x128xf32>
    %20 = vector.broadcast %16 : vector<1x128xf32> to vector<384x128xf32>
    %21 = arith.addf %19, %20 : vector<384x128xf32>
    %22 = math.exp %17 : vector<1x128xf32>
    %23 = vector.broadcast %22 : vector<1x128xf32> to vector<384x128xf32>
    %24 = arith.mulf %23, %18 : vector<384x128xf32>
    %25 = arith.addf %21, %24 : vector<384x128xf32>
    %c0_19 = arith.constant 0 : index
    %c0_20 = arith.constant 0 : index
    %26 = vector.load %arg10[%c0_19, %c0_20] : memref<384x128xf32, #tpu.memory_space<vmem>>, vector<384x128xf32>
    tpu.vector_store %arg10[%c0_19, %c0_20], %25 {strides = array<i32>} : memref<384x128xf32, #tpu.memory_space<vmem>>, vector<384x128xf32>,
    return
  }
  func.func @transform_0(%arg0: i32) -> (i32, i32) {
    %c0_i32 = arith.constant 0 : i32
    %c0_i32_0 = arith.constant 0 : i32
    return %arg0, %c0_i32 : i32, i32
  }
  func.func @transform_1(%arg0: i32) -> (i32, i32) {
    %c0_i32 = arith.constant 0 : i32
    %c0_i32_0 = arith.constant 0 : i32
    %c0_i32_1 = arith.constant 0 : i32
    return %c0_i32, %c0_i32_0 : i32, i32
  }
  func.func @transform_2(%arg0: i32) -> (i32, i32) {
    %c0_i32 = arith.constant 0 : i32
    %c0_i32_0 = arith.constant 0 : i32
    %c0_i32_1 = arith.constant 0 : i32
    return %c0_i32, %c0_i32_0 : i32, i32
  }
  func.func @transform_3(%arg0: i32) -> (i32, i32) {
    %c0_i32 = arith.constant 0 : i32
    %c0_i32_0 = arith.constant 0 : i32
    %c0_i32_1 = arith.constant 0 : i32
    return %c0_i32, %c0_i32_0 : i32, i32
  }
  func.func @transform_4(%arg0: i32) -> (i32, i32) {
    %c0_i32 = arith.constant 0 : i32
    %c0_i32_0 = arith.constant 0 : i32
    %c0_i32_1 = arith.constant 0 : i32
    return %c0_i32, %c0_i32_0 : i32, i32
  }
  func.func @transform_5(%arg0: i32) -> (i32, i32) {
    %c0_i32 = arith.constant 0 : i32
    %c0_i32_0 = arith.constant 0 : i32
    %c0_i32_1 = arith.constant 0 : i32
    return %c0_i32, %c0_i32_0 : i32, i32
  }
  func.func @transform_6(%arg0: i32) -> (i32, i32) {
    %c0_i32 = arith.constant 0 : i32
    %c0_i32_0 = arith.constant 0 : i32
    %c0_i32_1 = arith.constant 0 : i32
    return %c0_i32, %c0_i32_0 : i32, i32
  }
  func.func @transform_7(%arg0: i32) -> (i32, i32) {
    %c0_i32 = arith.constant 0 : i32
    %c0_i32_0 = arith.constant 0 : i32
    %c0_i32_1 = arith.constant 0 : i32
    return %c0_i32, %c0_i32_0 : i32, i32
  }
  func.func @transform_8(%arg0: i32) -> (i32, i32) {
    %c0_i32 = arith.constant 0 : i32
    %c0_i32_0 = arith.constant 0 : i32
    return %arg0, %c0_i32 : i32, i32
  }
  func.func @transform_9(%arg0: i32) -> (i32, i32) {
    %c0_i32 = arith.constant 0 : i32
    %c0_i32_0 = arith.constant 0 : i32
    return %arg0, %c0_i32 : i32, i32
  }
}

</mosaic_0001>

<llo_original>
// kernel: tpu_custom_call.1
$region0: #{tpu_custom_call.1}
  #allocation0 [shape = 'u32[]', space=smem, size = 0x4, offset = 0x4, fixed_abs, tag = 'smem constant byte address 0x4 - core index']
  #allocation1 [shape = 'u32[144,128]{1,0:T(1,128)}', space=vmem, size = 0x12000, scoped, tag = 'internal scratch']
  %s0 = inlined_call_operand.hbm [shape: bf16[384,128], index: 0, kind: input, shape index: {}]
  %s1 = inlined_call_operand.hbm [shape: bf16[128,128], index: 1, kind: input, shape index: {}]
  %s2 = inlined_call_operand.vmem [shape: f32[1,128], index: 2, kind: input, shape index: {}]
  %s3 = inlined_call_operand.hbm [shape: bf16[128,128], index: 3, kind: input, shape index: {}]
  %s4 = inlined_call_operand.vmem [shape: f32[1,128], index: 4, kind: input, shape index: {}]
  %s5 = inlined_call_operand.hbm [shape: bf16[128,128], index: 5, kind: input, shape index: {}]
  %s6 = inlined_call_operand.vmem [shape: f32[1,128], index: 6, kind: input, shape index: {}]
  %s7 = inlined_call_operand.vmem [shape: f32[1,128], index: 7, kind: input, shape index: {}]
  %s8 = inlined_call_operand.hbm [shape: f32[384,128], index: 8, kind: input, shape index: {}]
  %s9 = inlined_call_operand.hbm [shape: f32[384,128], index: 9, kind: output, shape index: {}]
  %s10 = sld [smem:[#allocation0]]
  $region66: #{tpu_custom_call.1} parent=0
    _
  %s12 = ssub.s32 1, %s10
  %s13 = scalar_select 0, %s12, %s10
  $region1: #{tpu_custom_call.1} parent=0
    #allocation2 [shape = 'u8[98304]{0}', space=vmem, size = 0x18000, scoped, tag = 'input window, operand 0, single buffered']
    #allocation3 [shape = 's32[1]{0}', space=sflag, size = 0x4, scoped, tag = 'scoped memory for tpu_custom_call.1']
    #allocation4 [shape = 's32[1]{0}', space=sflag, size = 0x4, scoped, tag = 'scoped memory for tpu_custom_call.1']
    #allocation5 [shape = 'u8[32768]{0}', space=vmem, size = 0x8000, scoped, tag = 'input window, operand 1, single buffered']
    #allocation6 [shape = 's32[1]{0}', space=sflag, size = 0x4, scoped, tag = 'scoped memory for tpu_custom_call.1']
    #allocation7 [shape = 'u8[32768]{0}', space=vmem, size = 0x8000, scoped, tag = 'input window, operand 3, single buffered']
    #allocation8 [shape = 'u8[32768]{0}', space=vmem, size = 0x8000, scoped, tag = 'input window, operand 5, single buffered']
    #allocation9 [shape = 's32[1]{0}', space=sflag, size = 0x4, scoped, tag = 'scoped memory for tpu_custom_call.1']
    #allocation10 [shape = 'u8[196608]{0}', space=vmem, size = 0x30000, scoped, tag = 'input window, operand 8, single buffered']
    #allocation11 [shape = 'u8[196608]{0}', space=vmem, size = 0x30000, scoped, tag = 'output window, operand 0, single buffered']
    %14 = vsyncpa [#allocation3], 0
    %15 = vsyncpa [#allocation6], 0
    %16 = vsyncpa [#allocation9], 0
    %17 = vsyncpa [#allocation4], 0
    // Predicated region
    $region2: #{tpu_custom_call.1} parent=1 // pred_check
      _
    $region3: #{tpu_custom_call.1} parent=1 // pred_check_branch
      %19 = sbr.rel (0) target = $region5
    $region4: #{tpu_custom_call.1} parent=1 // pred_region
      %s21 = ssub.s32 3072, 3072
      %22 = vsyncadd [#allocation3], %s21
      %s23 = sshll.u32 [#allocation2], 4
      %s24 = int_to_ptr.vmem [resolvable:$true] %s23
      %29 = dma.hbm_to_vmem [thread:$0]  %s0, 3072, %s24, [#allocation3], 64, 64, 4
    $region5: #{tpu_custom_call.1} parent=1 // pred_fallthru
      _
    // Predicated region
    $region6: #{tpu_custom_call.1} parent=1 // pred_check
      _
    $region7: #{tpu_custom_call.1} parent=1 // pred_check_branch
      %31 = sbr.rel (0) target = $region9
    $region8: #{tpu_custom_call.1} parent=1 // pred_region
      %s33 = ssub.s32 1024, 1024
      %34 = vsyncadd [#allocation6], %s33
      %s35 = sshll.u32 [#allocation5], 4
      %s36 = int_to_ptr.vmem [resolvable:$true] %s35
      %41 = dma.hbm_to_vmem [thread:$0]  %s1, 1024, %s36, [#allocation6], 64, 64, 4
    $region9: #{tpu_custom_call.1} parent=1 // pred_fallthru
      _
    // Predicated region
    $region10: #{tpu_custom_call.1} parent=1 // pred_check
      _
    $region11: #{tpu_custom_call.1} parent=1 // pred_check_branch
      %43 = sbr.rel (0) target = $region13
    $region12: #{tpu_custom_call.1} parent=1 // pred_region
      _
    $region13: #{tpu_custom_call.1} parent=1 // pred_fallthru
      _
    // Predicated region
    $region14: #{tpu_custom_call.1} parent=1 // pred_check
      _
    $region15: #{tpu_custom_call.1} parent=1 // pred_check_branch
      %45 = sbr.rel (0) target = $region17
    $region16: #{tpu_custom_call.1} parent=1 // pred_region
      %s47 = ssub.s32 1024, 1024
      %48 = vsyncadd [#allocation6], %s47
      %s49 = sshll.u32 [#allocation7], 4
      %s50 = int_to_ptr.vmem [resolvable:$true] %s49
      %55 = dma.hbm_to_vmem [thread:$0]  %s3, 1024, %s50, [#allocation6], 64, 64, 4
    $region17: #{tpu_custom_call.1} parent=1 // pred_fallthru
      _
    // Predicated region
    $region18: #{tpu_custom_call.1} parent=1 // pred_check
      _
    $region19: #{tpu_custom_call.1} parent=1 // pred_check_branch
      %57 = sbr.rel (0) target = $region21
    $region20: #{tpu_custom_call.1} parent=1 // pred_region
      _
    $region21: #{tpu_custom_call.1} parent=1 // pred_fallthru
      _
    // Predicated region
    $region22: #{tpu_custom_call.1} parent=1 // pred_check
      _
    $region23: #{tpu_custom_call.1} parent=1 // pred_check_branch
      %59 = sbr.rel (0) target = $region25
    $region24: #{tpu_custom_call.1} parent=1 // pred_region
      %s61 = ssub.s32 1024, 1024
      %62 = vsyncadd [#allocation9], %s61
      %s63 = sshll.u32 [#allocation8], 4
      %s64 = int_to_ptr.vmem [resolvable:$true] %s63
      %69 = dma.hbm_to_vmem [thread:$0]  %s5, 1024, %s64, [#allocation9], 64, 64, 4
    $region25: #{tpu_custom_call.1} parent=1 // pred_fallthru
      _
    // Predicated region
    $region26: #{tpu_custom_call.1} parent=1 // pred_check
      _
    $region27: #{tpu_custom_call.1} parent=1 // pred_check_branch
      %71 = sbr.rel (0) target = $region29
    $region28: #{tpu_custom_call.1} parent=1 // pred_region
      _
    $region29: #{tpu_custom_call.1} parent=1 // pred_fallthru
      _
    // Predicated region
    $region30: #{tpu_custom_call.1} parent=1 // pred_check
      _
    $region31: #{tpu_custom_call.1} parent=1 // pred_check_branch
      %73 = sbr.rel (0) target = $region33
    $region32: #{tpu_custom_call.1} parent=1 // pred_region
      _
    $region33: #{tpu_custom_call.1} parent=1 // pred_fallthru
      _
    // Predicated region
    $region34: #{tpu_custom_call.1} parent=1 // pred_check
      _
    $region35: #{tpu_custom_call.1} parent=1 // pred_check_branch
      %75 = sbr.rel (0) target = $region37
    $region36: #{tpu_custom_call.1} parent=1 // pred_region
      %s77 = ssub.s32 6144, 6144
      %78 = vsyncadd [#allocation9], %s77
      %s79 = sshll.u32 [#allocation10], 4
      %s80 = int_to_ptr.vmem [resolvable:$true] %s79
      %85 = dma.hbm_to_vmem [thread:$0]  %s8, 6144, %s80, [#allocation9], 128, 128, 8
    $region37: #{tpu_custom_call.1} parent=1 // pred_fallthru
      _
    // Predicated region
    $region38: #{tpu_custom_call.1} parent=1 // pred_check
      _
    $region39: #{tpu_custom_call.1} parent=1 // pred_check_branch
      %87 = sbr.rel (0) target = $region41
    $region40: #{tpu_custom_call.1} parent=1 // pred_region
      %88 = dma.done [#allocation3], 3072
    $region41: #{tpu_custom_call.1} parent=1 // pred_fallthru
      _
    // Predicated region
    $region42: #{tpu_custom_call.1} parent=1 // pred_check
      _
    $region43: #{tpu_custom_call.1} parent=1 // pred_check_branch
      %90 = sbr.rel (0) target = $region45
    $region44: #{tpu_custom_call.1} parent=1 // pred_region
      %91 = dma.done [#allocation6], 1024
    $region45: #{tpu_custom_call.1} parent=1 // pred_fallthru
      _
    // Predicated region
    $region46: #{tpu_custom_call.1} parent=1 // pred_check
      _
    $region47: #{tpu_custom_call.1} parent=1 // pred_check_branch
      %93 = sbr.rel (0) target = $region49
    $region48: #{tpu_custom_call.1} parent=1 // pred_region
      %94 = dma.done [#allocation6], 1024
    $region49: #{tpu_custom_call.1} parent=1 // pred_fallthru
      _
    // Predicated region
    $region50: #{tpu_custom_call.1} parent=1 // pred_check
      _
    $region51: #{tpu_custom_call.1} parent=1 // pred_check_branch
      %96 = sbr.rel (0) target = $region53
    $region52: #{tpu_custom_call.1} parent=1 // pred_region
      %97 = dma.done [#allocation9], 1024
    $region53: #{tpu_custom_call.1} parent=1 // pred_fallthru
      _
    // Predicated region
    $region54: #{tpu_custom_call.1} parent=1 // pred_check
      _
    $region55: #{tpu_custom_call.1} parent=1 // pred_check_branch
      %99 = sbr.rel (0) target = $region57
    $region56: #{tpu_custom_call.1} parent=1 // pred_region
      %100 = dma.done [#allocation9], 6144
    $region57: #{tpu_custom_call.1} parent=1 // pred_fallthru
      _
    %v102 = vld [vmem:[#allocation2] sm:$0xf]
    %v103 = vld [vmem:[#allocation2 + $0x4] sm:$0xf]
    %v104 = vld [vmem:[#allocation2 + $0x8] sm:$0xf]
    %v105 = vld [vmem:[#allocation2 + $0xc] sm:$0xf]
    %v106 = vld [vmem:[#allocation2 + $0x10] sm:$0xf]
    %v107 = vld [vmem:[#allocation2 + $0x14] sm:$0xf]
    %v108 = vld [vmem:[#allocation2 + $0x18] sm:$0xf]
    %v109 = vld [vmem:[#allocation2 + $0x1c] sm:$0xf]
    %v110 = vld [vmem:[#allocation2 + $0x20] sm:$0xf]
    %v111 = vld [vmem:[#allocation2 + $0x24] sm:$0xf]
    %v112 = vld [vmem:[#allocation2 + $0x28] sm:$0xf]
    %v113 = vld [vmem:[#allocation2 + $0x2c] sm:$0xf]
    %v114 = vld [vmem:[#allocation2 + $0x30] sm:$0xf]
    %v115 = vld [vmem:[#allocation2 + $0x34] sm:$0xf]
    %v116 = vld [vmem:[#allocation2 + $0x38] sm:$0xf]
    %v117 = vld [vmem:[#allocation2 + $0x3c] sm:$0xf]
    %v118 = vld [vmem:[#allocation2 + $0x40] sm:$0xf]
    %v119 = vld [vmem:[#allocation2 + $0x44] sm:$0xf]
    %v120 = vld [vmem:[#allocation2 + $0x48] sm:$0xf]
    %v121 = vld [vmem:[#allocation2 + $0x4c] sm:$0xf]
    %v122 = vld [vmem:[#allocation2 + $0x50] sm:$0xf]
    %v123 = vld [vmem:[#allocation2 + $0x54] sm:$0xf]
    %v124 = vld [vmem:[#allocation2 + $0x58] sm:$0xf]
    %v125 = vld [vmem:[#allocation2 + $0x5c] sm:$0xf]
    %v126 = vld [vmem:[#allocation2 + $0x60] sm:$0xf]
    %v127 = vld [vmem:[#allocation2 + $0x64] sm:$0xf]
    %v128 = vld [vmem:[#allocation2 + $0x68] sm:$0xf]
    %v129 = vld [vmem:[#allocation2 + $0x6c] sm:$0xf]
    %v130 = vld [vmem:[#allocation2 + $0x70] sm:$0xf]
    %v131 = vld [vmem:[#allocation2 + $0x74] sm:$0xf]
    %v132 = vld [vmem:[#allocation2 + $0x78] sm:$0xf]
    %v133 = vld [vmem:[#allocation2 + $0x7c] sm:$0xf]
    %v134 = vld [vmem:[#allocation2 + $0x80] sm:$0xf]
    %v135 = vld [vmem:[#allocation2 + $0x84] sm:$0xf]
    %v136 = vld [vmem:[#allocation2 + $0x88] sm:$0xf]
    %v137 = vld [vmem:[#allocation2 + $0x8c] sm:$0xf]
    %v138 = vld [vmem:[#allocation2 + $0x90] sm:$0xf]
    %v139 = vld [vmem:[#allocation2 + $0x94] sm:$0xf]
    %v140 = vld [vmem:[#allocation2 + $0x98] sm:$0xf]
    %v141 = vld [vmem:[#allocation2 + $0x9c] sm:$0xf]
    %v142 = vld [vmem:[#allocation2 + $0xa0] sm:$0xf]
    %v143 = vld [vmem:[#allocation2 + $0xa4] sm:$0xf]
    %v144 = vld [vmem:[#allocation2 + $0xa8] sm:$0xf]
    %v145 = vld [vmem:[#allocation2 + $0xac] sm:$0xf]
    %v146 = vld [vmem:[#allocation2 + $0xb0] sm:$0xf]
    %v147 = vld [vmem:[#allocation2 + $0xb4] sm:$0xf]
    %v148 = vld [vmem:[#allocation2 + $0xb8] sm:$0xf]
    %v149 = vld [vmem:[#allocation2 + $0xbc] sm:$0xf]
    %v150 = vld [vmem:[#allocation5] sm:$0xf]
    %v151 = vld [vmem:[#allocation5 + $0x4] sm:$0xf]
    %v152 = vld [vmem:[#allocation5 + $0x8] sm:$0xf]
    %v153 = vld [vmem:[#allocation5 + $0xc] sm:$0xf]
    %v154 = vld [vmem:[#allocation5 + $0x10] sm:$0xf]
    %v155 = vld [vmem:[#allocation5 + $0x14] sm:$0xf]
    %v156 = vld [vmem:[#allocation5 + $0x18] sm:$0xf]
    %v157 = vld [vmem:[#allocation5 + $0x1c] sm:$0xf]
    %v158 = vld [vmem:[#allocation5 + $0x20] sm:$0xf]
    %v159 = vld [vmem:[#allocation5 + $0x24] sm:$0xf]
    %v160 = vld [vmem:[#allocation5 + $0x28] sm:$0xf]
    %v161 = vld [vmem:[#allocation5 + $0x2c] sm:$0xf]
    %v162 = vld [vmem:[#allocation5 + $0x30] sm:$0xf]
    %v163 = vld [vmem:[#allocation5 + $0x34] sm:$0xf]
    %v164 = vld [vmem:[#allocation5 + $0x38] sm:$0xf]
    %v165 = vld [vmem:[#allocation5 + $0x3c] sm:$0xf]
    %v166 = vld [vmem:[%s2] sm:$0x1]
    %v168 = vlaneseq
    %v169 = vshrl.u32 %v168, 7
    %v170 = vsub.s32 0, %v169
    %v171 = vrot.slane %v166, %v170
    %v221 = vunpack.c.l.b16 %v102
    %v222 = vunpack.c.l.b16 %v103
    %v223 = vunpack.c.l.b16 %v104
    %v224 = vunpack.c.l.b16 %v105
    %v225 = vunpack.c.l.b16 %v106
    %v226 = vunpack.c.l.b16 %v107
    %v227 = vunpack.c.l.b16 %v108
    %v228 = vunpack.c.l.b16 %v109
    %v229 = vunpack.c.l.b16 %v110
    %v230 = vunpack.c.l.b16 %v111
    %v231 = vunpack.c.l.b16 %v112
    %v232 = vunpack.c.l.b16 %v113
    %v233 = vunpack.c.l.b16 %v114
    %v234 = vunpack.c.l.b16 %v115
    %v235 = vunpack.c.l.b16 %v116
    %v236 = vunpack.c.l.b16 %v117
    %v237 = vunpack.c.l.b16 %v118
    %v238 = vunpack.c.l.b16 %v119
    %v239 = vunpack.c.l.b16 %v120
    %v240 = vunpack.c.l.b16 %v121
    %v241 = vunpack.c.l.b16 %v122
    %v242 = vunpack.c.l.b16 %v123
    %v243 = vunpack.c.l.b16 %v124
    %v244 = vunpack.c.l.b16 %v125
    %v245 = vunpack.c.l.b16 %v126
    %v246 = vunpack.c.l.b16 %v127
    %v247 = vunpack.c.l.b16 %v128
    %v248 = vunpack.c.l.b16 %v129
    %v249 = vunpack.c.l.b16 %v130
    %v250 = vunpack.c.l.b16 %v131
    %v251 = vunpack.c.l.b16 %v132
    %v252 = vunpack.c.l.b16 %v133
    %v253 = vunpack.c.l.b16 %v134
    %v254 = vunpack.c.l.b16 %v135
    %v255 = vunpack.c.l.b16 %v136
    %v256 = vunpack.c.l.b16 %v137
    %v257 = vunpack.c.l.b16 %v138
    %v258 = vunpack.c.l.b16 %v139
    %v259 = vunpack.c.l.b16 %v140
    %v260 = vunpack.c.l.b16 %v141
    %v261 = vunpack.c.l.b16 %v142
    %v262 = vunpack.c.l.b16 %v143
    %v263 = vunpack.c.l.b16 %v144
    %v264 = vunpack.c.l.b16 %v145
    %v265 = vunpack.c.l.b16 %v146
    %v266 = vunpack.c.l.b16 %v147
    %v267 = vunpack.c.l.b16 %v148
    %v268 = vunpack.c.l.b16 %v149
    %v269 = vpack.c.b16 %v222, %v221
    %v270 = vpack.c.b16 %v224, %v223
    %v271 = vpack.c.b16 %v226, %v225
    %v272 = vpack.c.b16 %v228, %v227
    %v273 = vpack.c.b16 %v230, %v229
    %v274 = vpack.c.b16 %v232, %v231
    %v275 = vpack.c.b16 %v234, %v233
    %v276 = vpack.c.b16 %v236, %v235
    %v277 = vpack.c.b16 %v238, %v237
    %v278 = vpack.c.b16 %v240, %v239
    %v279 = vpack.c.b16 %v242, %v241
    %v280 = vpack.c.b16 %v244, %v243
    %v281 = vpack.c.b16 %v246, %v245
    %v282 = vpack.c.b16 %v248, %v247
    %v283 = vpack.c.b16 %v250, %v249
    %v284 = vpack.c.b16 %v252, %v251
    %v285 = vpack.c.b16 %v254, %v253
    %v286 = vpack.c.b16 %v256, %v255
    %v287 = vpack.c.b16 %v258, %v257
    %v288 = vpack.c.b16 %v260, %v259
    %v289 = vpack.c.b16 %v262, %v261
    %v290 = vpack.c.b16 %v264, %v263
    %v291 = vpack.c.b16 %v266, %v265
    %v292 = vpack.c.b16 %v268, %v267
    %v333 = vunpack.c.l.b16 %v150
    %v334 = vunpack.c.l.b16 %v151
    %v335 = vunpack.c.l.b16 %v152
    %v336 = vunpack.c.l.b16 %v153
    %v337 = vunpack.c.l.b16 %v154
    %v338 = vunpack.c.l.b16 %v155
    %v339 = vunpack.c.l.b16 %v156
    %v340 = vunpack.c.l.b16 %v157
    %v341 = vunpack.c.l.b16 %v158
    %v342 = vunpack.c.l.b16 %v159
    %v343 = vunpack.c.l.b16 %v160
    %v344 = vunpack.c.l.b16 %v161
    %v345 = vunpack.c.l.b16 %v162
    %v346 = vunpack.c.l.b16 %v163
    %v347 = vunpack.c.l.b16 %v164
    %v348 = vunpack.c.l.b16 %v165
    %v349 = vpack.c.b16 %v334, %v333
    %v350 = vpack.c.b16 %v336, %v335
    %v351 = vpack.c.b16 %v338, %v337
    %v352 = vpack.c.b16 %v340, %v339
    %v353 = vpack.c.b16 %v342, %v341
    %v354 = vpack.c.b16 %v344, %v343
    %v355 = vpack.c.b16 %v346, %v345
    %v356 = vpack.c.b16 %v348, %v347
    %365 = vmatprep.subr.bf16.mxu0 0
    %366 = vmatpush1.bf16.msra.mxu0 %v349
    %367 = vmatprep.subr.bf16.mxu0 0
    %368 = vmatpush1.bf16.msra.mxu0 %v350
    %369 = vmatprep.subr.bf16.mxu0 0
    %370 = vmatpush1.bf16.msra.mxu0 %v351
    %371 = vmatprep.subr.bf16.mxu0 0
    %372 = vmatpush1.bf16.msra.mxu0 %v352
    %373 = vmatprep.subr.bf16.mxu0 0
    %374 = vmatpush1.bf16.msra.mxu0 %v353
    %375 = vmatprep.subr.bf16.mxu0 0
    %376 = vmatpush1.bf16.msra.mxu0 %v354
    %377 = vmatprep.subr.bf16.mxu0 0
    %378 = vmatpush1.bf16.msra.mxu0 %v355
    %379 = vmatprep.subr.bf16.mxu0 0
    %380 = vmatpush1.bf16.msra.mxu0 %v356
    %381 = vmatprep.subr.bf16.mxu0 0
    %382 = vmatpush1.bf16.msra.mxu0 0
    %383 = vmatprep.subr.bf16.mxu0 0
    %384 = vmatpush1.bf16.msra.mxu0 0
    %385 = vmatprep.subr.bf16.mxu0 0
    %386 = vmatpush1.bf16.msra.mxu0 0
    %387 = vmatprep.subr.bf16.mxu0 0
    %388 = vmatpush1.bf16.msra.mxu0 0
    %389 = vmatprep.subr.bf16.mxu0 0
    %390 = vmatpush1.bf16.msra.mxu0 0
    %391 = vmatprep.subr.bf16.mxu0 0
    %392 = vmatpush1.bf16.msra.mxu0 0
    %393 = vmatprep.subr.bf16.mxu0 0
    %394 = vmatpush1.bf16.msra.mxu0 0
    %395 = vmatprep.subr.bf16.mxu0 0
    %396 = vmatpush1.bf16.msra.mxu0 0
    %397 = vmatprep.mubr.bf16.mxu0 0
    %398 = vmatmul.mubr.bf16.gmra.mrb[0].mxu0 %v269
    %v399 = vpop.f32.mrb[0].mxu0
    %v400 = vadd.f32 %v171, %v399
    %v401 = vpop.f32.mrb[0].mxu0
    %v402 = vpop.f32.mrb[0].mxu0
    %v403 = vadd.f32 %v171, %v402
    %v404 = vpop.f32.mrb[0].mxu0
    %405 = vmatprep.mubr.bf16.mxu0 0
    %406 = vmatmul.mubr.bf16.gmra.mrb[0].mxu0 %v270
    %v407 = vpop.f32.mrb[0].mxu0
    %v408 = vadd.f32 %v171, %v407
    %v409 = vpop.f32.mrb[0].mxu0
    %v410 = vpop.f32.mrb[0].mxu0
    %v411 = vadd.f32 %v171, %v410
    %v412 = vpop.f32.mrb[0].mxu0
    %413 = vmatprep.mubr.bf16.mxu0 0
    %414 = vmatmul.mubr.bf16.gmra.mrb[0].mxu0 %v271
    %v415 = vpop.f32.mrb[0].mxu0
    %v416 = vadd.f32 %v171, %v415
    %v417 = vpop.f32.mrb[0].mxu0
    %v418 = vpop.f32.mrb[0].mxu0
    %v419 = vadd.f32 %v171, %v418
    %v420 = vpop.f32.mrb[0].mxu0
    %421 = vmatprep.mubr.bf16.mxu0 0
    %422 = vmatmul.mubr.bf16.gmra.mrb[0].mxu0 %v272
    %v423 = vpop.f32.mrb[0].mxu0
    %v424 = vadd.f32 %v171, %v423
    %v425 = vpop.f32.mrb[0].mxu0
    %v426 = vpop.f32.mrb[0].mxu0
    %v427 = vadd.f32 %v171, %v426
    %v428 = vpop.f32.mrb[0].mxu0
    %429 = vmatprep.mubr.bf16.mxu0 0
    %430 = vmatmul.mubr.bf16.gmra.mrb[0].mxu0 %v273
    %v431 = vpop.f32.mrb[0].mxu0
    %v432 = vadd.f32 %v171, %v431
    %v433 = vpop.f32.mrb[0].mxu0
    %v434 = vpop.f32.mrb[0].mxu0
    %v435 = vadd.f32 %v171, %v434
    %v436 = vpop.f32.mrb[0].mxu0
    %437 = vmatprep.mubr.bf16.mxu0 0
    %438 = vmatmul.mubr.bf16.gmra.mrb[0].mxu0 %v274
    %v439 = vpop.f32.mrb[0].mxu0
    %v440 = vadd.f32 %v171, %v439
    %v441 = vpop.f32.mrb[0].mxu0
    %v442 = vpop.f32.mrb[0].mxu0
    %v443 = vadd.f32 %v171, %v442
    %v444 = vpop.f32.mrb[0].mxu0
    %445 = vmatprep.mubr.bf16.mxu0 0
    %446 = vmatmul.mubr.bf16.gmra.mrb[0].mxu0 %v275
    %v447 = vpop.f32.mrb[0].mxu0
    %v448 = vadd.f32 %v171, %v447
    %v449 = vpop.f32.mrb[0].mxu0
    %v450 = vpop.f32.mrb[0].mxu0
    %v451 = vadd.f32 %v171, %v450
    %v452 = vpop.f32.mrb[0].mxu0
    %453 = vmatprep.mubr.bf16.mxu0 0
    %454 = vmatmul.mubr.bf16.gmra.mrb[0].mxu0 %v276
    %v455 = vpop.f32.mrb[0].mxu0
    %v456 = vadd.f32 %v171, %v455
    %v457 = vpop.f32.mrb[0].mxu0
    %v458 = vpop.f32.mrb[0].mxu0
    %v459 = vadd.f32 %v171, %v458
    %v460 = vpop.f32.mrb[0].mxu0
    %461 = vmatprep.mubr.bf16.mxu0 0
    %462 = vmatmul.mubr.bf16.gmra.mrb[0].mxu0 %v277
    %v463 = vpop.f32.mrb[0].mxu0
    %v464 = vadd.f32 %v171, %v463
    %v465 = vpop.f32.mrb[0].mxu0
    %v466 = vpop.f32.mrb[0].mxu0
    %v467 = vadd.f32 %v171, %v466
    %v468 = vpop.f32.mrb[0].mxu0
    %469 = vmatprep.mubr.bf16.mxu0 0
    %470 = vmatmul.mubr.bf16.gmra.mrb[0].mxu0 %v278
    %v471 = vpop.f32.mrb[0].mxu0
    %v472 = vadd.f32 %v171, %v471
    %v473 = vpop.f32.mrb[0].mxu0
    %v474 = vpop.f32.mrb[0].mxu0
    %v475 = vadd.f32 %v171, %v474
    %v476 = vpop.f32.mrb[0].mxu0
    %477 = vmatprep.mubr.bf16.mxu0 0
    %478 = vmatmul.mubr.bf16.gmra.mrb[0].mxu0 %v279
    %v479 = vpop.f32.mrb[0].mxu0
    %v480 = vadd.f32 %v171, %v479
    %v481 = vpop.f32.mrb[0].mxu0
    %v482 = vpop.f32.mrb[0].mxu0
    %v483 = vadd.f32 %v171, %v482
    %v484 = vpop.f32.mrb[0].mxu0
    %485 = vmatprep.mubr.bf16.mxu0 0
    %486 = vmatmul.mubr.bf16.gmra.mrb[0].mxu0 %v280
    %v487 = vpop.f32.mrb[0].mxu0
    %v488 = vadd.f32 %v171, %v487
    %v489 = vpop.f32.mrb[0].mxu0
    %v490 = vpop.f32.mrb[0].mxu0
    %v491 = vadd.f32 %v171, %v490
    %v492 = vpop.f32.mrb[0].mxu0
    %493 = vmatprep.mubr.bf16.mxu0 0
    %494 = vmatmul.mubr.bf16.gmra.mrb[0].mxu0 %v281
    %v495 = vpop.f32.mrb[0].mxu0
    %v496 = vadd.f32 %v171, %v495
    %v497 = vpop.f32.mrb[0].mxu0
    %v498 = vpop.f32.mrb[0].mxu0
    %v499 = vadd.f32 %v171, %v498
    %v500 = vpop.f32.mrb[0].mxu0
    %501 = vmatprep.mubr.bf16.mxu0 0
    %502 = vmatmul.mubr.bf16.gmra.mrb[0].mxu0 %v282
    %v503 = vpop.f32.mrb[0].mxu0
    %v504 = vadd.f32 %v171, %v503
    %v505 = vpop.f32.mrb[0].mxu0
    %v506 = vpop.f32.mrb[0].mxu0
    %v507 = vadd.f32 %v171, %v506
    %v508 = vpop.f32.mrb[0].mxu0
    %509 = vmatprep.mubr.bf16.mxu0 0
    %510 = vmatmul.mubr.bf16.gmra.mrb[0].mxu0 %v283
    %v511 = vpop.f32.mrb[0].mxu0
    %v512 = vadd.f32 %v171, %v511
    %v513 = vpop.f32.mrb[0].mxu0
    %v514 = vpop.f32.mrb[0].mxu0
    %v515 = vadd.f32 %v171, %v514
    %v516 = vpop.f32.mrb[0].mxu0
    %517 = vmatprep.mubr.bf16.mxu0 0
    %518 = vmatmul.mubr.bf16.gmra.mrb[0].mxu0 %v284
    %v519 = vpop.f32.mrb[0].mxu0
    %v520 = vadd.f32 %v171, %v519
    %v521 = vpop.f32.mrb[0].mxu0
    %v522 = vpop.f32.mrb[0].mxu0
    %v523 = vadd.f32 %v171, %v522
    %v524 = vpop.f32.mrb[0].mxu0
    %525 = vmatprep.mubr.bf16.mxu0 0
    %526 = vmatmul.mubr.bf16.gmra.mrb[0].mxu0 %v285
    %v527 = vpop.f32.mrb[0].mxu0
    %v528 = vadd.f32 %v171, %v527
    %v529 = vpop.f32.mrb[0].mxu0
    %v530 = vpop.f32.mrb[0].mxu0
    %v531 = vadd.f32 %v171, %v530
    %v532 = vpop.f32.mrb[0].mxu0
    %533 = vmatprep.mubr.bf16.mxu0 0
    %534 = vmatmul.mubr.bf16.gmra.mrb[0].mxu0 %v286
    %v535 = vpop.f32.mrb[0].mxu0
    %v536 = vadd.f32 %v171, %v535
    %v537 = vpop.f32.mrb[0].mxu0
    %v538 = vpop.f32.mrb[0].mxu0
    %v539 = vadd.f32 %v171, %v538
    %v540 = vpop.f32.mrb[0].mxu0
    %541 = vmatprep.mubr.bf16.mxu0 0
    %542 = vmatmul.mubr.bf16.gmra.mrb[0].mxu0 %v287
    %v543 = vpop.f32.mrb[0].mxu0
    %v544 = vadd.f32 %v171, %v543
    %v545 = vpop.f32.mrb[0].mxu0
    %v546 = vpop.f32.mrb[0].mxu0
    %v547 = vadd.f32 %v171, %v546
    %v548 = vpop.f32.mrb[0].mxu0
    %549 = vmatprep.mubr.bf16.mxu0 0
    %550 = vmatmul.mubr.bf16.gmra.mrb[0].mxu0 %v288
    %v551 = vpop.f32.mrb[0].mxu0
    %v552 = vadd.f32 %v171, %v551
    %v553 = vpop.f32.mrb[0].mxu0
    %v554 = vpop.f32.mrb[0].mxu0
    %v555 = vadd.f32 %v171, %v554
    %v556 = vpop.f32.mrb[0].mxu0
    %557 = vmatprep.mubr.bf16.mxu0 0
    %558 = vmatmul.mubr.bf16.gmra.mrb[0].mxu0 %v289
    %v559 = vpop.f32.mrb[0].mxu0
    %v560 = vadd.f32 %v171, %v559
    %v561 = vpop.f32.mrb[0].mxu0
    %v562 = vpop.f32.mrb[0].mxu0
    %v563 = vadd.f32 %v171, %v562
    %v564 = vpop.f32.mrb[0].mxu0
    %565 = vmatprep.mubr.bf16.mxu0 0
    %566 = vmatmul.mubr.bf16.gmra.mrb[0].mxu0 %v290
    %v567 = vpop.f32.mrb[0].mxu0
    %v568 = vadd.f32 %v171, %v567
    %v569 = vpop.f32.mrb[0].mxu0
    %v570 = vpop.f32.mrb[0].mxu0
    %v571 = vadd.f32 %v171, %v570
    %v572 = vpop.f32.mrb[0].mxu0
    %573 = vmatprep.mubr.bf16.mxu0 0
    %574 = vmatmul.mubr.bf16.gmra.mrb[0].mxu0 %v291
    %v575 = vpop.f32.mrb[0].mxu0
    %v576 = vadd.f32 %v171, %v575
    %v577 = vpop.f32.mrb[0].mxu0
    %v578 = vpop.f32.mrb[0].mxu0
    %v579 = vadd.f32 %v171, %v578
    %v580 = vpop.f32.mrb[0].mxu0
    %581 = vmatprep.mubr.bf16.mxu0 0
    %582 = vmatmul.mubr.bf16.gmra.mrb[0].mxu0 %v292
    %v583 = vpop.f32.mrb[0].mxu0
    %v584 = vadd.f32 %v171, %v583
    %v585 = vpop.f32.mrb[0].mxu0
    %v586 = vpop.f32.mrb[0].mxu0
    %v587 = vadd.f32 %v171, %v586
    %v588 = vpop.f32.mrb[0].mxu0
    %589 = vdwg.mxu0
    %v590 = vtanh.pop %v400
    %v591 = vtanh.pop %v403
    %v592 = vtanh.pop %v408
    %v593 = vtanh.pop %v411
    %v594 = vtanh.pop %v416
    %v595 = vtanh.pop %v419
    %v596 = vtanh.pop %v424
    %v597 = vtanh.pop %v427
    %v598 = vtanh.pop %v432
    %v599 = vtanh.pop %v435
    %v600 = vtanh.pop %v440
    %v601 = vtanh.pop %v443
    %v602 = vtanh.pop %v448
    %v603 = vtanh.pop %v451
    %v604 = vtanh.pop %v456
    %v605 = vtanh.pop %v459
    %v606 = vtanh.pop %v464
    %v607 = vtanh.pop %v467
    %v608 = vtanh.pop %v472
    %v609 = vtanh.pop %v475
    %v610 = vtanh.pop %v480
    %v611 = vtanh.pop %v483
    %v612 = vtanh.pop %v488
    %v613 = vtanh.pop %v491
    %v614 = vtanh.pop %v496
    %v615 = vtanh.pop %v499
    %v616 = vtanh.pop %v504
    %v617 = vtanh.pop %v507
    %v618 = vtanh.pop %v512
    %v619 = vtanh.pop %v515
    %v620 = vtanh.pop %v520
    %v621 = vtanh.pop %v523
    %v622 = vtanh.pop %v528
    %v623 = vtanh.pop %v531
    %v624 = vtanh.pop %v536
    %v625 = vtanh.pop %v539
    %v626 = vtanh.pop %v544
    %v627 = vtanh.pop %v547
    %v628 = vtanh.pop %v552
    %v629 = vtanh.pop %v555
    %v630 = vtanh.pop %v560
    %v631 = vtanh.pop %v563
    %v632 = vtanh.pop %v568
    %v633 = vtanh.pop %v571
    %v634 = vtanh.pop %v576
    %v635 = vtanh.pop %v579
    %v636 = vtanh.pop %v584
    %v637 = vtanh.pop %v587
    %v638 = vpack.c.bf16 %v591, %v590
    %v639 = vpack.c.bf16 %v593, %v592
    %v640 = vpack.c.bf16 %v595, %v594
    %v641 = vpack.c.bf16 %v597, %v596
    %v642 = vpack.c.bf16 %v599, %v598
    %v643 = vpack.c.bf16 %v601, %v600
    %v644 = vpack.c.bf16 %v603, %v602
    %v645 = vpack.c.bf16 %v605, %v604
    %v646 = vpack.c.bf16 %v607, %v606
    %v647 = vpack.c.bf16 %v609, %v608
    %v648 = vpack.c.bf16 %v611, %v610
    %v649 = vpack.c.bf16 %v613, %v612
    %v650 = vpack.c.bf16 %v615, %v614
    %v651 = vpack.c.bf16 %v617, %v616
    %v652 = vpack.c.bf16 %v619, %v618
    %v653 = vpack.c.bf16 %v621, %v620
    %v654 = vpack.c.bf16 %v623, %v622
    %v655 = vpack.c.bf16 %v625, %v624
    %v656 = vpack.c.bf16 %v627, %v626
    %v657 = vpack.c.bf16 %v629, %v628
    %v658 = vpack.c.bf16 %v631, %v630
    %v659 = vpack.c.bf16 %v633, %v632
    %v660 = vpack.c.bf16 %v635, %v634
    %v661 = vpack.c.bf16 %v637, %v636
    %v662 = vld [vmem:[#allocation7] sm:$0xf]
    %v663 = vld [vmem:[#allocation7 + $0x4] sm:$0xf]
    %v664 = vld [vmem:[#allocation7 + $0x8] sm:$0xf]
    %v665 = vld [vmem:[#allocation7 + $0xc] sm:$0xf]
    %v666 = vld [vmem:[#allocation7 + $0x10] sm:$0xf]
    %v667 = vld [vmem:[#allocation7 + $0x14] sm:$0xf]
    %v668 = vld [vmem:[#allocation7 + $0x18] sm:$0xf]
    %v669 = vld [vmem:[#allocation7 + $0x1c] sm:$0xf]
    %v670 = vld [vmem:[#allocation7 + $0x20] sm:$0xf]
    %v671 = vld [vmem:[#allocation7 + $0x24] sm:$0xf]
    %v672 = vld [vmem:[#allocation7 + $0x28] sm:$0xf]
    %v673 = vld [vmem:[#allocation7 + $0x2c] sm:$0xf]
    %v674 = vld [vmem:[#allocation7 + $0x30] sm:$0xf]
    %v675 = vld [vmem:[#allocation7 + $0x34] sm:$0xf]
    %v676 = vld [vmem:[#allocation7 + $0x38] sm:$0xf]
    %v677 = vld [vmem:[#allocation7 + $0x3c] sm:$0xf]
    %v678 = vld [vmem:[%s4] sm:$0x1]
    %v680 = vlaneseq
    %v681 = vshrl.u32 %v680, 7
    %v682 = vsub.s32 0, %v681
    %v683 = vrot.slane %v678, %v682
    %v701 = vunpack.c.l.b16 %v662
    %v702 = vunpack.c.l.b16 %v663
    %v703 = vunpack.c.l.b16 %v664
    %v704 = vunpack.c.l.b16 %v665
    %v705 = vunpack.c.l.b16 %v666
    %v706 = vunpack.c.l.b16 %v667
    %v707 = vunpack.c.l.b16 %v668
    %v708 = vunpack.c.l.b16 %v669
    %v709 = vunpack.c.l.b16 %v670
    %v710 = vunpack.c.l.b16 %v671
    %v711 = vunpack.c.l.b16 %v672
    %v712 = vunpack.c.l.b16 %v673
    %v713 = vunpack.c.l.b16 %v674
    %v714 = vunpack.c.l.b16 %v675
    %v715 = vunpack.c.l.b16 %v676
    %v716 = vunpack.c.l.b16 %v677
    %v717 = vpack.c.b16 %v702, %v701
    %v718 = vpack.c.b16 %v704, %v703
    %v719 = vpack.c.b16 %v706, %v705
    %v720 = vpack.c.b16 %v708, %v707
    %v721 = vpack.c.b16 %v710, %v709
    %v722 = vpack.c.b16 %v712, %v711
    %v723 = vpack.c.b16 %v714, %v713
    %v724 = vpack.c.b16 %v716, %v715
    %733 = vmatprep.subr.bf16.mxu0 0
    %734 = vmatpush1.bf16.msra.mxu0 %v717
    %735 = vmatprep.subr.bf16.mxu0 0
    %736 = vmatpush1.bf16.msra.mxu0 %v718
    %737 = vmatprep.subr.bf16.mxu0 0
    %738 = vmatpush1.bf16.msra.mxu0 %v719
    %739 = vmatprep.subr.bf16.mxu0 0
    %740 = vmatpush1.bf16.msra.mxu0 %v720
    %741 = vmatprep.subr.bf16.mxu0 0
    %742 = vmatpush1.bf16.msra.mxu0 %v721
    %743 = vmatprep.subr.bf16.mxu0 0
    %744 = vmatpush1.bf16.msra.mxu0 %v722
    %745 = vmatprep.subr.bf16.mxu0 0
    %746 = vmatpush1.bf16.msra.mxu0 %v723
    %747 = vmatprep.subr.bf16.mxu0 0
    %748 = vmatpush1.bf16.msra.mxu0 %v724
    %749 = vmatprep.subr.bf16.mxu0 0
    %750 = vmatpush1.bf16.msra.mxu0 0
    %751 = vmatprep.subr.bf16.mxu0 0
    %752 = vmatpush1.bf16.msra.mxu0 0
    %753 = vmatprep.subr.bf16.mxu0 0
    %754 = vmatpush1.bf16.msra.mxu0 0
    %755 = vmatprep.subr.bf16.mxu0 0
    %756 = vmatpush1.bf16.msra.mxu0 0
    %757 = vmatprep.subr.bf16.mxu0 0
    %758 = vmatpush1.bf16.msra.mxu0 0
    %759 = vmatprep.subr.bf16.mxu0 0
    %760 = vmatpush1.bf16.msra.mxu0 0
    %761 = vmatprep.subr.bf16.mxu0 0
    %762 = vmatpush1.bf16.msra.mxu0 0
    %763 = vmatprep.subr.bf16.mxu0 0
    %764 = vmatpush1.bf16.msra.mxu0 0
    %765 = vmatprep.mubr.bf16.mxu0 0
    %766 = vmatmul.mubr.bf16.gmra.mrb[0].mxu0 %v638
    %v767 = vpop.f32.mrb[0].mxu0
    %v768 = vadd.f32 %v683, %v767
    %v769 = vpop.f32.mrb[0].mxu0
    %v770 = vpop.f32.mrb[0].mxu0
    %v771 = vadd.f32 %v683, %v770
    %v772 = vpop.f32.mrb[0].mxu0
    %773 = vmatprep.mubr.bf16.mxu0 0
    %774 = vmatmul.mubr.bf16.gmra.mrb[0].mxu0 %v639
    %v775 = vpop.f32.mrb[0].mxu0
    %v776 = vadd.f32 %v683, %v775
    %v777 = vpop.f32.mrb[0].mxu0
    %v778 = vpop.f32.mrb[0].mxu0
    %v779 = vadd.f32 %v683, %v778
    %v780 = vpop.f32.mrb[0].mxu0
    %781 = vmatprep.mubr.bf16.mxu0 0
    %782 = vmatmul.mubr.bf16.gmra.mrb[0].mxu0 %v640
    %v783 = vpop.f32.mrb[0].mxu0
    %v784 = vadd.f32 %v683, %v783
    %v785 = vpop.f32.mrb[0].mxu0
    %v786 = vpop.f32.mrb[0].mxu0
    %v787 = vadd.f32 %v683, %v786
    %v788 = vpop.f32.mrb[0].mxu0
    %789 = vmatprep.mubr.bf16.mxu0 0
    %790 = vmatmul.mubr.bf16.gmra.mrb[0].mxu0 %v641
    %v791 = vpop.f32.mrb[0].mxu0
    %v792 = vadd.f32 %v683, %v791
    %v793 = vpop.f32.mrb[0].mxu0
    %v794 = vpop.f32.mrb[0].mxu0
    %v795 = vadd.f32 %v683, %v794
    %v796 = vpop.f32.mrb[0].mxu0
    %797 = vmatprep.mubr.bf16.mxu0 0
    %798 = vmatmul.mubr.bf16.gmra.mrb[0].mxu0 %v642
    %v799 = vpop.f32.mrb[0].mxu0
    %v800 = vadd.f32 %v683, %v799
    %v801 = vpop.f32.mrb[0].mxu0
    %v802 = vpop.f32.mrb[0].mxu0
    %v803 = vadd.f32 %v683, %v802
    %v804 = vpop.f32.mrb[0].mxu0
    %805 = vmatprep.mubr.bf16.mxu0 0
    %806 = vmatmul.mubr.bf16.gmra.mrb[0].mxu0 %v643
    %v807 = vpop.f32.mrb[0].mxu0
    %v808 = vadd.f32 %v683, %v807
    %v809 = vpop.f32.mrb[0].mxu0
    %v810 = vpop.f32.mrb[0].mxu0
    %v811 = vadd.f32 %v683, %v810
    %v812 = vpop.f32.mrb[0].mxu0
    %813 = vmatprep.mubr.bf16.mxu0 0
    %814 = vmatmul.mubr.bf16.gmra.mrb[0].mxu0 %v644
    %v815 = vpop.f32.mrb[0].mxu0
    %v816 = vadd.f32 %v683, %v815
    %v817 = vpop.f32.mrb[0].mxu0
    %v818 = vpop.f32.mrb[0].mxu0
    %v819 = vadd.f32 %v683, %v818
    %v820 = vpop.f32.mrb[0].mxu0
    %821 = vmatprep.mubr.bf16.mxu0 0
    %822 = vmatmul.mubr.bf16.gmra.mrb[0].mxu0 %v645
    %v823 = vpop.f32.mrb[0].mxu0
    %v824 = vadd.f32 %v683, %v823
    %v825 = vpop.f32.mrb[0].mxu0
    %v826 = vpop.f32.mrb[0].mxu0
    %v827 = vadd.f32 %v683, %v826
    %v828 = vpop.f32.mrb[0].mxu0
    %829 = vmatprep.mubr.bf16.mxu0 0
    %830 = vmatmul.mubr.bf16.gmra.mrb[0].mxu0 %v646
    %v831 = vpop.f32.mrb[0].mxu0
    %v832 = vadd.f32 %v683, %v831
    %v833 = vpop.f32.mrb[0].mxu0
    %v834 = vpop.f32.mrb[0].mxu0
    %v835 = vadd.f32 %v683, %v834
    %v836 = vpop.f32.mrb[0].mxu0
    %837 = vmatprep.mubr.bf16.mxu0 0
    %838 = vmatmul.mubr.bf16.gmra.mrb[0].mxu0 %v647
    %v839 = vpop.f32.mrb[0].mxu0
    %v840 = vadd.f32 %v683, %v839
    %v841 = vpop.f32.mrb[0].mxu0
    %v842 = vpop.f32.mrb[0].mxu0
    %v843 = vadd.f32 %v683, %v842
    %v844 = vpop.f32.mrb[0].mxu0
    %845 = vmatprep.mubr.bf16.mxu0 0
    %846 = vmatmul.mubr.bf16.gmra.mrb[0].mxu0 %v648
    %v847 = vpop.f32.mrb[0].mxu0
    %v848 = vadd.f32 %v683, %v847
    %v849 = vpop.f32.mrb[0].mxu0
    %v850 = vpop.f32.mrb[0].mxu0
    %v851 = vadd.f32 %v683, %v850
    %v852 = vpop.f32.mrb[0].mxu0
    %853 = vmatprep.mubr.bf16.mxu0 0
    %854 = vmatmul.mubr.bf16.gmra.mrb[0].mxu0 %v649
    %v855 = vpop.f32.mrb[0].mxu0
    %v856 = vadd.f32 %v683, %v855
    %v857 = vpop.f32.mrb[0].mxu0
    %v858 = vpop.f32.mrb[0].mxu0
    %v859 = vadd.f32 %v683, %v858
    %v860 = vpop.f32.mrb[0].mxu0
    %861 = vmatprep.mubr.bf16.mxu0 0
    %862 = vmatmul.mubr.bf16.gmra.mrb[0].mxu0 %v650
    %v863 = vpop.f32.mrb[0].mxu0
    %v864 = vadd.f32 %v683, %v863
    %v865 = vpop.f32.mrb[0].mxu0
    %v866 = vpop.f32.mrb[0].mxu0
    %v867 = vadd.f32 %v683, %v866
    %v868 = vpop.f32.mrb[0].mxu0
    %869 = vmatprep.mubr.bf16.mxu0 0
    %870 = vmatmul.mubr.bf16.gmra.mrb[0].mxu0 %v651
    %v871 = vpop.f32.mrb[0].mxu0
    %v872 = vadd.f32 %v683, %v871
    %v873 = vpop.f32.mrb[0].mxu0
    %v874 = vpop.f32.mrb[0].mxu0
    %v875 = vadd.f32 %v683, %v874
    %v876 = vpop.f32.mrb[0].mxu0
    %877 = vmatprep.mubr.bf16.mxu0 0
    %878 = vmatmul.mubr.bf16.gmra.mrb[0].mxu0 %v652
    %v879 = vpop.f32.mrb[0].mxu0
    %v880 = vadd.f32 %v683, %v879
    %v881 = vpop.f32.mrb[0].mxu0
    %v882 = vpop.f32.mrb[0].mxu0
    %v883 = vadd.f32 %v683, %v882
    %v884 = vpop.f32.mrb[0].mxu0
    %885 = vmatprep.mubr.bf16.mxu0 0
    %886 = vmatmul.mubr.bf16.gmra.mrb[0].mxu0 %v653
    %v887 = vpop.f32.mrb[0].mxu0
    %v888 = vadd.f32 %v683, %v887
    %v889 = vpop.f32.mrb[0].mxu0
    %v890 = vpop.f32.mrb[0].mxu0
    %v891 = vadd.f32 %v683, %v890
    %v892 = vpop.f32.mrb[0].mxu0
    %893 = vmatprep.mubr.bf16.mxu0 0
    %894 = vmatmul.mubr.bf16.gmra.mrb[0].mxu0 %v654
    %v895 = vpop.f32.mrb[0].mxu0
    %v896 = vadd.f32 %v683, %v895
    %v897 = vpop.f32.mrb[0].mxu0
    %v898 = vpop.f32.mrb[0].mxu0
    %v899 = vadd.f32 %v683, %v898
    %v900 = vpop.f32.mrb[0].mxu0
    %901 = vmatprep.mubr.bf16.mxu0 0
    %902 = vmatmul.mubr.bf16.gmra.mrb[0].mxu0 %v655
    %v903 = vpop.f32.mrb[0].mxu0
    %v904 = vadd.f32 %v683, %v903
    %v905 = vpop.f32.mrb[0].mxu0
    %v906 = vpop.f32.mrb[0].mxu0
    %v907 = vadd.f32 %v683, %v906
    %v908 = vpop.f32.mrb[0].mxu0
    %909 = vmatprep.mubr.bf16.mxu0 0
    %910 = vmatmul.mubr.bf16.gmra.mrb[0].mxu0 %v656
    %v911 = vpop.f32.mrb[0].mxu0
    %v912 = vadd.f32 %v683, %v911
    %v913 = vpop.f32.mrb[0].mxu0
    %v914 = vpop.f32.mrb[0].mxu0
    %v915 = vadd.f32 %v683, %v914
    %v916 = vpop.f32.mrb[0].mxu0
    %917 = vmatprep.mubr.bf16.mxu0 0
    %918 = vmatmul.mubr.bf16.gmra.mrb[0].mxu0 %v657
    %v919 = vpop.f32.mrb[0].mxu0
    %v920 = vadd.f32 %v683, %v919
    %v921 = vpop.f32.mrb[0].mxu0
    %v922 = vpop.f32.mrb[0].mxu0
    %v923 = vadd.f32 %v683, %v922
    %v924 = vpop.f32.mrb[0].mxu0
    %925 = vmatprep.mubr.bf16.mxu0 0
    %926 = vmatmul.mubr.bf16.gmra.mrb[0].mxu0 %v658
    %v927 = vpop.f32.mrb[0].mxu0
    %v928 = vadd.f32 %v683, %v927
    %v929 = vpop.f32.mrb[0].mxu0
    %v930 = vpop.f32.mrb[0].mxu0
    %v931 = vadd.f32 %v683, %v930
    %v932 = vpop.f32.mrb[0].mxu0
    %933 = vmatprep.mubr.bf16.mxu0 0
    %934 = vmatmul.mubr.bf16.gmra.mrb[0].mxu0 %v659
    %v935 = vpop.f32.mrb[0].mxu0
    %v936 = vadd.f32 %v683, %v935
    %v937 = vpop.f32.mrb[0].mxu0
    %v938 = vpop.f32.mrb[0].mxu0
    %v939 = vadd.f32 %v683, %v938
    %v940 = vpop.f32.mrb[0].mxu0
    %941 = vmatprep.mubr.bf16.mxu0 0
    %942 = vmatmul.mubr.bf16.gmra.mrb[0].mxu0 %v660
    %v943 = vpop.f32.mrb[0].mxu0
    %v944 = vadd.f32 %v683, %v943
    %v945 = vpop.f32.mrb[0].mxu0
    %v946 = vpop.f32.mrb[0].mxu0
    %v947 = vadd.f32 %v683, %v946
    %v948 = vpop.f32.mrb[0].mxu0
    %949 = vmatprep.mubr.bf16.mxu0 0
    %950 = vmatmul.mubr.bf16.gmra.mrb[0].mxu0 %v661
    %v951 = vpop.f32.mrb[0].mxu0
    %v952 = vadd.f32 %v683, %v951
    %v953 = vpop.f32.mrb[0].mxu0
    %v954 = vpop.f32.mrb[0].mxu0
    %v955 = vadd.f32 %v683, %v954
    %v956 = vpop.f32.mrb[0].mxu0
    %957 = vdwg.mxu0
    %v958 = vtanh.pop %v768
    %v959 = vtanh.pop %v771
    %v960 = vtanh.pop %v776
    %v961 = vtanh.pop %v779
    %v962 = vtanh.pop %v784
    %v963 = vtanh.pop %v787
    %v964 = vtanh.pop %v792
    %v965 = vtanh.pop %v795
    %v966 = vtanh.pop %v800
    %v967 = vtanh.pop %v803
    %v968 = vtanh.pop %v808
    %v969 = vtanh.pop %v811
    %v970 = vtanh.pop %v816
    %v971 = vtanh.pop %v819
    %v972 = vtanh.pop %v824
    %v973 = vtanh.pop %v827
    %v974 = vtanh.pop %v832
    %v975 = vtanh.pop %v835
    %v976 = vtanh.pop %v840
    %v977 = vtanh.pop %v843
    %v978 = vtanh.pop %v848
    %v979 = vtanh.pop %v851
    %v980 = vtanh.pop %v856
    %v981 = vtanh.pop %v859
    %v982 = vtanh.pop %v864
    %v983 = vtanh.pop %v867
    %v984 = vtanh.pop %v872
    %v985 = vtanh.pop %v875
    %v986 = vtanh.pop %v880
    %v987 = vtanh.pop %v883
    %v988 = vtanh.pop %v888
    %v989 = vtanh.pop %v891
    %v990 = vtanh.pop %v896
    %v991 = vtanh.pop %v899
    %v992 = vtanh.pop %v904
    %v993 = vtanh.pop %v907
    %v994 = vtanh.pop %v912
    %v995 = vtanh.pop %v915
    %v996 = vtanh.pop %v920
    %v997 = vtanh.pop %v923
    %v998 = vtanh.pop %v928
    %v999 = vtanh.pop %v931
    %v1000 = vtanh.pop %v936
    %v1001 = vtanh.pop %v939
    %v1002 = vtanh.pop %v944
    %v1003 = vtanh.pop %v947
    %v1004 = vtanh.pop %v952
    %v1005 = vtanh.pop %v955
    %v1006 = vpack.c.bf16 %v959, %v958
    %v1007 = vpack.c.bf16 %v961, %v960
    %v1008 = vpack.c.bf16 %v963, %v962
    %v1009 = vpack.c.bf16 %v965, %v964
    %v1010 = vpack.c.bf16 %v967, %v966
    %v1011 = vpack.c.bf16 %v969, %v968
    %v1012 = vpack.c.bf16 %v971, %v970
    %v1013 = vpack.c.bf16 %v973, %v972
    %v1014 = vpack.c.bf16 %v975, %v974
    %v1015 = vpack.c.bf16 %v977, %v976
    %v1016 = vpack.c.bf16 %v979, %v978
    %v1017 = vpack.c.bf16 %v981, %v980
    %v1018 = vpack.c.bf16 %v983, %v982
    %v1019 = vpack.c.bf16 %v985, %v984
    %v1020 = vpack.c.bf16 %v987, %v986
    %v1021 = vpack.c.bf16 %v989, %v988
    %v1022 = vpack.c.bf16 %v991, %v990
    %v1023 = vpack.c.bf16 %v993, %v992
    %v1024 = vpack.c.bf16 %v995, %v994
    %v1025 = vpack.c.bf16 %v997, %v996
    %v1026 = vpack.c.bf16 %v999, %v998
    %v1027 = vpack.c.bf16 %v1001, %v1000
    %v1028 = vpack.c.bf16 %v1003, %v1002
    %v1029 = vpack.c.bf16 %v1005, %v1004
    %v1030 = vld [vmem:[#allocation8] sm:$0xf]
    %v1031 = vld [vmem:[#allocation8 + $0x4] sm:$0xf]
    %v1032 = vld [vmem:[#allocation8 + $0x8] sm:$0xf]
    %v1033 = vld [vmem:[#allocation8 + $0xc] sm:$0xf]
    %v1034 = vld [vmem:[#allocation8 + $0x10] sm:$0xf]
    %v1035 = vld [vmem:[#allocation8 + $0x14] sm:$0xf]
    %v1036 = vld [vmem:[#allocation8 + $0x18] sm:$0xf]
    %v1037 = vld [vmem:[#allocation8 + $0x1c] sm:$0xf]
    %v1038 = vld [vmem:[#allocation8 + $0x20] sm:$0xf]
    %v1039 = vld [vmem:[#allocation8 + $0x24] sm:$0xf]
    %v1040 = vld [vmem:[#allocation8 + $0x28] sm:$0xf]
    %v1041 = vld [vmem:[#allocation8 + $0x2c] sm:$0xf]
    %v1042 = vld [vmem:[#allocation8 + $0x30] sm:$0xf]
    %v1043 = vld [vmem:[#allocation8 + $0x34] sm:$0xf]
    %v1044 = vld [vmem:[#allocation8 + $0x38] sm:$0xf]
    %v1045 = vld [vmem:[#allocation8 + $0x3c] sm:$0xf]
    %v1046 = vld [vmem:[%s6] sm:$0x1]
    %v1047 = vld [vmem:[%s7] sm:$0x1]
    %v1048 = vld [vmem:[#allocation10] sm:$0xff]
    %v1049 = vld [vmem:[#allocation10 + $0x8] sm:$0xff]
    %v1050 = vld [vmem:[#allocation10 + $0x10] sm:$0xff]
    %v1051 = vld [vmem:[#allocation10 + $0x18] sm:$0xff]
    %v1052 = vld [vmem:[#allocation10 + $0x20] sm:$0xff]
    %v1053 = vld [vmem:[#allocation10 + $0x28] sm:$0xff]
    %v1054 = vld [vmem:[#allocation10 + $0x30] sm:$0xff]
    %v1055 = vld [vmem:[#allocation10 + $0x38] sm:$0xff]
    %v1056 = vld [vmem:[#allocation10 + $0x40] sm:$0xff]
    %v1057 = vld [vmem:[#allocation10 + $0x48] sm:$0xff]
    %v1058 = vld [vmem:[#allocation10 + $0x50] sm:$0xff]
    %v1059 = vld [vmem:[#allocation10 + $0x58] sm:$0xff]
    %v1060 = vld [vmem:[#allocation10 + $0x60] sm:$0xff]
    %v1061 = vld [vmem:[#allocation10 + $0x68] sm:$0xff]
    %v1062 = vld [vmem:[#allocation10 + $0x70] sm:$0xff]
    %v1063 = vld [vmem:[#allocation10 + $0x78] sm:$0xff]
    %v1064 = vld [vmem:[#allocation10 + $0x80] sm:$0xff]
    %v1065 = vld [vmem:[#allocation10 + $0x88] sm:$0xff]
    %v1066 = vld [vmem:[#allocation10 + $0x90] sm:$0xff]
    %v1067 = vld [vmem:[#allocation10 + $0x98] sm:$0xff]
    %v1068 = vld [vmem:[#allocation10 + $0xa0] sm:$0xff]
    %v1069 = vld [vmem:[#allocation10 + $0xa8] sm:$0xff]
    %v1070 = vld [vmem:[#allocation10 + $0xb0] sm:$0xff]
    %v1071 = vld [vmem:[#allocation10 + $0xb8] sm:$0xff]
    %v1072 = vld [vmem:[#allocation10 + $0xc0] sm:$0xff]
    %v1073 = vld [vmem:[#allocation10 + $0xc8] sm:$0xff]
    %v1074 = vld [vmem:[#allocation10 + $0xd0] sm:$0xff]
    %v1075 = vld [vmem:[#allocation10 + $0xd8] sm:$0xff]
    %v1076 = vld [vmem:[#allocation10 + $0xe0] sm:$0xff]
    %v1077 = vld [vmem:[#allocation10 + $0xe8] sm:$0xff]
    %v1078 = vld [vmem:[#allocation10 + $0xf0] sm:$0xff]
    %v1079 = vld [vmem:[#allocation10 + $0xf8] sm:$0xff]
    %v1080 = vld [vmem:[#allocation10 + $0x100] sm:$0xff]
    %v1081 = vld [vmem:[#allocation10 + $0x108] sm:$0xff]
    %v1082 = vld [vmem:[#allocation10 + $0x110] sm:$0xff]
    %v1083 = vld [vmem:[#allocation10 + $0x118] sm:$0xff]
    %v1084 = vld [vmem:[#allocation10 + $0x120] sm:$0xff]
    %v1085 = vld [vmem:[#allocation10 + $0x128] sm:$0xff]
    %v1086 = vld [vmem:[#allocation10 + $0x130] sm:$0xff]
    %v1087 = vld [vmem:[#allocation10 + $0x138] sm:$0xff]
    %v1088 = vld [vmem:[#allocation10 + $0x140] sm:$0xff]
    %v1089 = vld [vmem:[#allocation10 + $0x148] sm:$0xff]
    %v1090 = vld [vmem:[#allocation10 + $0x150] sm:$0xff]
    %v1091 = vld [vmem:[#allocation10 + $0x158] sm:$0xff]
    %v1092 = vld [vmem:[#allocation10 + $0x160] sm:$0xff]
    %v1093 = vld [vmem:[#allocation10 + $0x168] sm:$0xff]
    %v1094 = vld [vmem:[#allocation10 + $0x170] sm:$0xff]
    %v1095 = vld [vmem:[#allocation10 + $0x178] sm:$0xff]
    %v1097 = vlaneseq
    %v1098 = vshrl.u32 %v1097, 7
    %v1099 = vsub.s32 0, %v1098
    %v1100 = vrot.slane %v1046, %v1099
    %v1118 = vunpack.c.l.b16 %v1030
    %v1119 = vunpack.c.l.b16 %v1031
    %v1120 = vunpack.c.l.b16 %v1032
    %v1121 = vunpack.c.l.b16 %v1033
    %v1122 = vunpack.c.l.b16 %v1034
    %v1123 = vunpack.c.l.b16 %v1035
    %v1124 = vunpack.c.l.b16 %v1036
    %v1125 = vunpack.c.l.b16 %v1037
    %v1126 = vunpack.c.l.b16 %v1038
    %v1127 = vunpack.c.l.b16 %v1039
    %v1128 = vunpack.c.l.b16 %v1040
    %v1129 = vunpack.c.l.b16 %v1041
    %v1130 = vunpack.c.l.b16 %v1042
    %v1131 = vunpack.c.l.b16 %v1043
    %v1132 = vunpack.c.l.b16 %v1044
    %v1133 = vunpack.c.l.b16 %v1045
    %v1134 = vpack.c.b16 %v1119, %v1118
    %v1135 = vpack.c.b16 %v1121, %v1120
    %v1136 = vpack.c.b16 %v1123, %v1122
    %v1137 = vpack.c.b16 %v1125, %v1124
    %v1138 = vpack.c.b16 %v1127, %v1126
    %v1139 = vpack.c.b16 %v1129, %v1128
    %v1140 = vpack.c.b16 %v1131, %v1130
    %v1141 = vpack.c.b16 %v1133, %v1132
    %1150 = vmatprep.subr.bf16.mxu0 0
    %1151 = vmatpush1.bf16.msra.mxu0 %v1134
    %1152 = vmatprep.subr.bf16.mxu0 0
    %1153 = vmatpush1.bf16.msra.mxu0 %v1135
    %1154 = vmatprep.subr.bf16.mxu0 0
    %1155 = vmatpush1.bf16.msra.mxu0 %v1136
    %1156 = vmatprep.subr.bf16.mxu0 0
    %1157 = vmatpush1.bf16.msra.mxu0 %v1137
    %1158 = vmatprep.subr.bf16.mxu0 0
    %1159 = vmatpush1.bf16.msra.mxu0 %v1138
    %1160 = vmatprep.subr.bf16.mxu0 0
    %1161 = vmatpush1.bf16.msra.mxu0 %v1139
    %1162 = vmatprep.subr.bf16.mxu0 0
    %1163 = vmatpush1.bf16.msra.mxu0 %v1140
    %1164 = vmatprep.subr.bf16.mxu0 0
    %1165 = vmatpush1.bf16.msra.mxu0 %v1141
    %1166 = vmatprep.subr.bf16.mxu0 0
    %1167 = vmatpush1.bf16.msra.mxu0 0
    %1168 = vmatprep.subr.bf16.mxu0 0
    %1169 = vmatpush1.bf16.msra.mxu0 0
    %1170 = vmatprep.subr.bf16.mxu0 0
    %1171 = vmatpush1.bf16.msra.mxu0 0
    %1172 = vmatprep.subr.bf16.mxu0 0
    %1173 = vmatpush1.bf16.msra.mxu0 0
    %1174 = vmatprep.subr.bf16.mxu0 0
    %1175 = vmatpush1.bf16.msra.mxu0 0
    %1176 = vmatprep.subr.bf16.mxu0 0
    %1177 = vmatpush1.bf16.msra.mxu0 0
    %1178 = vmatprep.subr.bf16.mxu0 0
    %1179 = vmatpush1.bf16.msra.mxu0 0
    %1180 = vmatprep.subr.bf16.mxu0 0
    %1181 = vmatpush1.bf16.msra.mxu0 0
    %1182 = vmatprep.mubr.bf16.mxu0 0
    %1183 = vmatmul.mubr.bf16.gmra.mrb[0].mxu0 %v1006
    %v1184 = vpop.f32.mrb[0].mxu0
    %v1185 = vadd.f32 %v1100, %v1184
    %v1186 = vpop.f32.mrb[0].mxu0
    %v1187 = vpop.f32.mrb[0].mxu0
    %v1188 = vadd.f32 %v1100, %v1187
    %v1189 = vpop.f32.mrb[0].mxu0
    %1190 = vmatprep.mubr.bf16.mxu0 0
    %1191 = vmatmul.mubr.bf16.gmra.mrb[0].mxu0 %v1007
    %v1192 = vpop.f32.mrb[0].mxu0
    %v1193 = vadd.f32 %v1100, %v1192
    %v1194 = vpop.f32.mrb[0].mxu0
    %v1195 = vpop.f32.mrb[0].mxu0
    %v1196 = vadd.f32 %v1100, %v1195
    %v1197 = vpop.f32.mrb[0].mxu0
    %1198 = vmatprep.mubr.bf16.mxu0 0
    %1199 = vmatmul.mubr.bf16.gmra.mrb[0].mxu0 %v1008
    %v1200 = vpop.f32.mrb[0].mxu0
    %v1201 = vadd.f32 %v1100, %v1200
    %v1202 = vpop.f32.mrb[0].mxu0
    %v1203 = vpop.f32.mrb[0].mxu0
    %v1204 = vadd.f32 %v1100, %v1203
    %v1205 = vpop.f32.mrb[0].mxu0
    %1206 = vmatprep.mubr.bf16.mxu0 0
    %1207 = vmatmul.mubr.bf16.gmra.mrb[0].mxu0 %v1009
    %v1208 = vpop.f32.mrb[0].mxu0
    %v1209 = vadd.f32 %v1100, %v1208
    %v1210 = vpop.f32.mrb[0].mxu0
    %v1211 = vpop.f32.mrb[0].mxu0
    %v1212 = vadd.f32 %v1100, %v1211
    %v1213 = vpop.f32.mrb[0].mxu0
    %1214 = vmatprep.mubr.bf16.mxu0 0
    %1215 = vmatmul.mubr.bf16.gmra.mrb[0].mxu0 %v1010
    %v1216 = vpop.f32.mrb[0].mxu0
    %v1217 = vadd.f32 %v1100, %v1216
    %v1218 = vpop.f32.mrb[0].mxu0
    %v1219 = vpop.f32.mrb[0].mxu0
    %v1220 = vadd.f32 %v1100, %v1219
    %v1221 = vpop.f32.mrb[0].mxu0
    %1222 = vmatprep.mubr.bf16.mxu0 0
    %1223 = vmatmul.mubr.bf16.gmra.mrb[0].mxu0 %v1011
    %v1224 = vpop.f32.mrb[0].mxu0
    %v1225 = vadd.f32 %v1100, %v1224
    %v1226 = vpop.f32.mrb[0].mxu0
    %v1227 = vpop.f32.mrb[0].mxu0
    %v1228 = vadd.f32 %v1100, %v1227
    %v1229 = vpop.f32.mrb[0].mxu0
    %1230 = vmatprep.mubr.bf16.mxu0 0
    %1231 = vmatmul.mubr.bf16.gmra.mrb[0].mxu0 %v1012
    %v1232 = vpop.f32.mrb[0].mxu0
    %v1233 = vadd.f32 %v1100, %v1232
    %v1234 = vpop.f32.mrb[0].mxu0
    %v1235 = vpop.f32.mrb[0].mxu0
    %v1236 = vadd.f32 %v1100, %v1235
    %v1237 = vpop.f32.mrb[0].mxu0
    %1238 = vmatprep.mubr.bf16.mxu0 0
    %1239 = vmatmul.mubr.bf16.gmra.mrb[0].mxu0 %v1013
    %v1240 = vpop.f32.mrb[0].mxu0
    %v1241 = vadd.f32 %v1100, %v1240
    %v1242 = vpop.f32.mrb[0].mxu0
    %v1243 = vpop.f32.mrb[0].mxu0
    %v1244 = vadd.f32 %v1100, %v1243
    %v1245 = vpop.f32.mrb[0].mxu0
    %1246 = vmatprep.mubr.bf16.mxu0 0
    %1247 = vmatmul.mubr.bf16.gmra.mrb[0].mxu0 %v1014
    %v1248 = vpop.f32.mrb[0].mxu0
    %v1249 = vadd.f32 %v1100, %v1248
    %v1250 = vpop.f32.mrb[0].mxu0
    %v1251 = vpop.f32.mrb[0].mxu0
    %v1252 = vadd.f32 %v1100, %v1251
    %v1253 = vpop.f32.mrb[0].mxu0
    %1254 = vmatprep.mubr.bf16.mxu0 0
    %1255 = vmatmul.mubr.bf16.gmra.mrb[0].mxu0 %v1015
    %v1256 = vpop.f32.mrb[0].mxu0
    %v1257 = vadd.f32 %v1100, %v1256
    %v1258 = vpop.f32.mrb[0].mxu0
    %v1259 = vpop.f32.mrb[0].mxu0
    %v1260 = vadd.f32 %v1100, %v1259
    %v1261 = vpop.f32.mrb[0].mxu0
    %1262 = vmatprep.mubr.bf16.mxu0 0
    %1263 = vmatmul.mubr.bf16.gmra.mrb[0].mxu0 %v1016
    %v1264 = vpop.f32.mrb[0].mxu0
    %v1265 = vadd.f32 %v1100, %v1264
    %v1266 = vpop.f32.mrb[0].mxu0
    %v1267 = vpop.f32.mrb[0].mxu0
    %v1268 = vadd.f32 %v1100, %v1267
    %v1269 = vpop.f32.mrb[0].mxu0
    %1270 = vmatprep.mubr.bf16.mxu0 0
    %1271 = vmatmul.mubr.bf16.gmra.mrb[0].mxu0 %v1017
    %v1272 = vpop.f32.mrb[0].mxu0
    %v1273 = vadd.f32 %v1100, %v1272
    %v1274 = vpop.f32.mrb[0].mxu0
    %v1275 = vpop.f32.mrb[0].mxu0
    %v1276 = vadd.f32 %v1100, %v1275
    %v1277 = vpop.f32.mrb[0].mxu0
    %1278 = vmatprep.mubr.bf16.mxu0 0
    %1279 = vmatmul.mubr.bf16.gmra.mrb[0].mxu0 %v1018
    %v1280 = vpop.f32.mrb[0].mxu0
    %v1281 = vadd.f32 %v1100, %v1280
    %v1282 = vpop.f32.mrb[0].mxu0
    %v1283 = vpop.f32.mrb[0].mxu0
    %v1284 = vadd.f32 %v1100, %v1283
    %v1285 = vpop.f32.mrb[0].mxu0
    %1286 = vmatprep.mubr.bf16.mxu0 0
    %1287 = vmatmul.mubr.bf16.gmra.mrb[0].mxu0 %v1019
    %v1288 = vpop.f32.mrb[0].mxu0
    %v1289 = vadd.f32 %v1100, %v1288
    %v1290 = vpop.f32.mrb[0].mxu0
    %v1291 = vpop.f32.mrb[0].mxu0
    %v1292 = vadd.f32 %v1100, %v1291
    %v1293 = vpop.f32.mrb[0].mxu0
    %1294 = vmatprep.mubr.bf16.mxu0 0
    %1295 = vmatmul.mubr.bf16.gmra.mrb[0].mxu0 %v1020
    %v1296 = vpop.f32.mrb[0].mxu0
    %v1297 = vadd.f32 %v1100, %v1296
    %v1298 = vpop.f32.mrb[0].mxu0
    %v1299 = vpop.f32.mrb[0].mxu0
    %v1300 = vadd.f32 %v1100, %v1299
    %v1301 = vpop.f32.mrb[0].mxu0
    %1302 = vmatprep.mubr.bf16.mxu0 0
    %1303 = vmatmul.mubr.bf16.gmra.mrb[0].mxu0 %v1021
    %v1304 = vpop.f32.mrb[0].mxu0
    %v1305 = vadd.f32 %v1100, %v1304
    %v1306 = vpop.f32.mrb[0].mxu0
    %v1307 = vpop.f32.mrb[0].mxu0
    %v1308 = vadd.f32 %v1100, %v1307
    %v1309 = vpop.f32.mrb[0].mxu0
    %1310 = vmatprep.mubr.bf16.mxu0 0
    %1311 = vmatmul.mubr.bf16.gmra.mrb[0].mxu0 %v1022
    %v1312 = vpop.f32.mrb[0].mxu0
    %v1313 = vadd.f32 %v1100, %v1312
    %v1314 = vpop.f32.mrb[0].mxu0
    %v1315 = vpop.f32.mrb[0].mxu0
    %v1316 = vadd.f32 %v1100, %v1315
    %v1317 = vpop.f32.mrb[0].mxu0
    %1318 = vmatprep.mubr.bf16.mxu0 0
    %1319 = vmatmul.mubr.bf16.gmra.mrb[0].mxu0 %v1023
    %v1320 = vpop.f32.mrb[0].mxu0
    %v1321 = vadd.f32 %v1100, %v1320
    %v1322 = vpop.f32.mrb[0].mxu0
    %v1323 = vpop.f32.mrb[0].mxu0
    %v1324 = vadd.f32 %v1100, %v1323
    %v1325 = vpop.f32.mrb[0].mxu0
    %1326 = vmatprep.mubr.bf16.mxu0 0
    %1327 = vmatmul.mubr.bf16.gmra.mrb[0].mxu0 %v1024
    %v1328 = vpop.f32.mrb[0].mxu0
    %v1329 = vadd.f32 %v1100, %v1328
    %v1330 = vpop.f32.mrb[0].mxu0
    %v1331 = vpop.f32.mrb[0].mxu0
    %v1332 = vadd.f32 %v1100, %v1331
    %v1333 = vpop.f32.mrb[0].mxu0
    %1334 = vmatprep.mubr.bf16.mxu0 0
    %1335 = vmatmul.mubr.bf16.gmra.mrb[0].mxu0 %v1025
    %v1336 = vpop.f32.mrb[0].mxu0
    %v1337 = vadd.f32 %v1100, %v1336
    %v1338 = vpop.f32.mrb[0].mxu0
    %v1339 = vpop.f32.mrb[0].mxu0
    %v1340 = vadd.f32 %v1100, %v1339
    %v1341 = vpop.f32.mrb[0].mxu0
    %1342 = vmatprep.mubr.bf16.mxu0 0
    %1343 = vmatmul.mubr.bf16.gmra.mrb[0].mxu0 %v1026
    %v1344 = vpop.f32.mrb[0].mxu0
    %v1345 = vadd.f32 %v1100, %v1344
    %v1346 = vpop.f32.mrb[0].mxu0
    %v1347 = vpop.f32.mrb[0].mxu0
    %v1348 = vadd.f32 %v1100, %v1347
    %v1349 = vpop.f32.mrb[0].mxu0
    %1350 = vmatprep.mubr.bf16.mxu0 0
    %1351 = vmatmul.mubr.bf16.gmra.mrb[0].mxu0 %v1027
    %v1352 = vpop.f32.mrb[0].mxu0
    %v1353 = vadd.f32 %v1100, %v1352
    %v1354 = vpop.f32.mrb[0].mxu0
    %v1355 = vpop.f32.mrb[0].mxu0
    %v1356 = vadd.f32 %v1100, %v1355
    %v1357 = vpop.f32.mrb[0].mxu0
    %1358 = vmatprep.mubr.bf16.mxu0 0
    %1359 = vmatmul.mubr.bf16.gmra.mrb[0].mxu0 %v1028
    %v1360 = vpop.f32.mrb[0].mxu0
    %v1361 = vadd.f32 %v1100, %v1360
    %v1362 = vpop.f32.mrb[0].mxu0
    %v1363 = vpop.f32.mrb[0].mxu0
    %v1364 = vadd.f32 %v1100, %v1363
    %v1365 = vpop.f32.mrb[0].mxu0
    %1366 = vmatprep.mubr.bf16.mxu0 0
    %1367 = vmatmul.mubr.bf16.gmra.mrb[0].mxu0 %v1029
    %v1368 = vpop.f32.mrb[0].mxu0
    %v1369 = vadd.f32 %v1100, %v1368
    %v1370 = vpop.f32.mrb[0].mxu0
    %v1371 = vpop.f32.mrb[0].mxu0
    %v1372 = vadd.f32 %v1100, %v1371
    %v1373 = vpop.f32.mrb[0].mxu0
    %1374 = vdwg.mxu0
    %v1375 = vmul.f32 %v1047, 1.442695
    %v1376 = vpow.pop %v1375
    %v1378 = vlaneseq
    %v1379 = vshrl.u32 %v1378, 7
    %v1380 = vsub.s32 0, %v1379
    %v1381 = vrot.slane %v1376, %v1380
    %v1383 = vmul.f32 %v1381, %v1048
    %v1384 = vmul.f32 %v1381, %v1049
    %v1385 = vmul.f32 %v1381, %v1050
    %v1386 = vmul.f32 %v1381, %v1051
    %v1387 = vmul.f32 %v1381, %v1052
    %v1388 = vmul.f32 %v1381, %v1053
    %v1389 = vmul.f32 %v1381, %v1054
    %v1390 = vmul.f32 %v1381, %v1055
    %v1391 = vmul.f32 %v1381, %v1056
    %v1392 = vmul.f32 %v1381, %v1057
    %v1393 = vmul.f32 %v1381, %v1058
    %v1394 = vmul.f32 %v1381, %v1059
    %v1395 = vmul.f32 %v1381, %v1060
    %v1396 = vmul.f32 %v1381, %v1061
    %v1397 = vmul.f32 %v1381, %v1062
    %v1398 = vmul.f32 %v1381, %v1063
    %v1399 = vmul.f32 %v1381, %v1064
    %v1400 = vmul.f32 %v1381, %v1065
    %v1401 = vmul.f32 %v1381, %v1066
    %v1402 = vmul.f32 %v1381, %v1067
    %v1403 = vmul.f32 %v1381, %v1068
    %v1404 = vmul.f32 %v1381, %v1069
    %v1405 = vmul.f32 %v1381, %v1070
    %v1406 = vmul.f32 %v1381, %v1071
    %v1407 = vmul.f32 %v1381, %v1072
    %v1408 = vmul.f32 %v1381, %v1073
    %v1409 = vmul.f32 %v1381, %v1074
    %v1410 = vmul.f32 %v1381, %v1075
    %v1411 = vmul.f32 %v1381, %v1076
    %v1412 = vmul.f32 %v1381, %v1077
    %v1413 = vmul.f32 %v1381, %v1078
    %v1414 = vmul.f32 %v1381, %v1079
    %v1415 = vmul.f32 %v1381, %v1080
    %v1416 = vmul.f32 %v1381, %v1081
    %v1417 = vmul.f32 %v1381, %v1082
    %v1418 = vmul.f32 %v1381, %v1083
    %v1419 = vmul.f32 %v1381, %v1084
    %v1420 = vmul.f32 %v1381, %v1085
    %v1421 = vmul.f32 %v1381, %v1086
    %v1422 = vmul.f32 %v1381, %v1087
    %v1423 = vmul.f32 %v1381, %v1088
    %v1424 = vmul.f32 %v1381, %v1089
    %v1425 = vmul.f32 %v1381, %v1090
    %v1426 = vmul.f32 %v1381, %v1091
    %v1427 = vmul.f32 %v1381, %v1092
    %v1428 = vmul.f32 %v1381, %v1093
    %v1429 = vmul.f32 %v1381, %v1094
    %v1430 = vmul.f32 %v1381, %v1095
    %v1431 = vadd.f32 %v1185, %v1383
    %v1432 = vadd.f32 %v1188, %v1384
    %v1433 = vadd.f32 %v1193, %v1385
    %v1434 = vadd.f32 %v1196, %v1386
    %v1435 = vadd.f32 %v1201, %v1387
    %v1436 = vadd.f32 %v1204, %v1388
    %v1437 = vadd.f32 %v1209, %v1389
    %v1438 = vadd.f32 %v1212, %v1390
    %v1439 = vadd.f32 %v1217, %v1391
    %v1440 = vadd.f32 %v1220, %v1392
    %v1441 = vadd.f32 %v1225, %v1393
    %v1442 = vadd.f32 %v1228, %v1394
    %v1443 = vadd.f32 %v1233, %v1395
    %v1444 = vadd.f32 %v1236, %v1396
    %v1445 = vadd.f32 %v1241, %v1397
    %v1446 = vadd.f32 %v1244, %v1398
    %v1447 = vadd.f32 %v1249, %v1399
    %v1448 = vadd.f32 %v1252, %v1400
    %v1449 = vadd.f32 %v1257, %v1401
    %v1450 = vadd.f32 %v1260, %v1402
    %v1451 = vadd.f32 %v1265, %v1403
    %v1452 = vadd.f32 %v1268, %v1404
    %v1453 = vadd.f32 %v1273, %v1405
    %v1454 = vadd.f32 %v1276, %v1406
    %v1455 = vadd.f32 %v1281, %v1407
    %v1456 = vadd.f32 %v1284, %v1408
    %v1457 = vadd.f32 %v1289, %v1409
    %v1458 = vadd.f32 %v1292, %v1410
    %v1459 = vadd.f32 %v1297, %v1411
    %v1460 = vadd.f32 %v1300, %v1412
    %v1461 = vadd.f32 %v1305, %v1413
    %v1462 = vadd.f32 %v1308, %v1414
    %v1463 = vadd.f32 %v1313, %v1415
    %v1464 = vadd.f32 %v1316, %v1416
    %v1465 = vadd.f32 %v1321, %v1417
    %v1466 = vadd.f32 %v1324, %v1418
    %v1467 = vadd.f32 %v1329, %v1419
    %v1468 = vadd.f32 %v1332, %v1420
    %v1469 = vadd.f32 %v1337, %v1421
    %v1470 = vadd.f32 %v1340, %v1422
    %v1471 = vadd.f32 %v1345, %v1423
    %v1472 = vadd.f32 %v1348, %v1424
    %v1473 = vadd.f32 %v1353, %v1425
    %v1474 = vadd.f32 %v1356, %v1426
    %v1475 = vadd.f32 %v1361, %v1427
    %v1476 = vadd.f32 %v1364, %v1428
    %v1477 = vadd.f32 %v1369, %v1429
    %v1478 = vadd.f32 %v1372, %v1430
    %1479 = vst [vmem:[#allocation11] sm:$0xff] %v1431
    %1480 = vst [vmem:[#allocation11 + $0x8] sm:$0xff] %v1432
    %1481 = vst [vmem:[#allocation11 + $0x10] sm:$0xff] %v1433
    %1482 = vst [vmem:[#allocation11 + $0x18] sm:$0xff] %v1434
    %1483 = vst [vmem:[#allocation11 + $0x20] sm:$0xff] %v1435
    %1484 = vst [vmem:[#allocation11 + $0x28] sm:$0xff] %v1436
    %1485 = vst [vmem:[#allocation11 + $0x30] sm:$0xff] %v1437
    %1486 = vst [vmem:[#allocation11 + $0x38] sm:$0xff] %v1438
    %1487 = vst [vmem:[#allocation11 + $0x40] sm:$0xff] %v1439
    %1488 = vst [vmem:[#allocation11 + $0x48] sm:$0xff] %v1440
    %1489 = vst [vmem:[#allocation11 + $0x50] sm:$0xff] %v1441
    %1490 = vst [vmem:[#allocation11 + $0x58] sm:$0xff] %v1442
    %1491 = vst [vmem:[#allocation11 + $0x60] sm:$0xff] %v1443
    %1492 = vst [vmem:[#allocation11 + $0x68] sm:$0xff] %v1444
    %1493 = vst [vmem:[#allocation11 + $0x70] sm:$0xff] %v1445
    %1494 = vst [vmem:[#allocation11 + $0x78] sm:$0xff] %v1446
    %1495 = vst [vmem:[#allocation11 + $0x80] sm:$0xff] %v1447
    %1496 = vst [vmem:[#allocation11 + $0x88] sm:$0xff] %v1448
    %1497 = vst [vmem:[#allocation11 + $0x90] sm:$0xff] %v1449
    %1498 = vst [vmem:[#allocation11 + $0x98] sm:$0xff] %v1450
    %1499 = vst [vmem:[#allocation11 + $0xa0] sm:$0xff] %v1451
    %1500 = vst [vmem:[#allocation11 + $0xa8] sm:$0xff] %v1452
    %1501 = vst [vmem:[#allocation11 + $0xb0] sm:$0xff] %v1453
    %1502 = vst [vmem:[#allocation11 + $0xb8] sm:$0xff] %v1454
    %1503 = vst [vmem:[#allocation11 + $0xc0] sm:$0xff] %v1455
    %1504 = vst [vmem:[#allocation11 + $0xc8] sm:$0xff] %v1456
    %1505 = vst [vmem:[#allocation11 + $0xd0] sm:$0xff] %v1457
    %1506 = vst [vmem:[#allocation11 + $0xd8] sm:$0xff] %v1458
    %1507 = vst [vmem:[#allocation11 + $0xe0] sm:$0xff] %v1459
    %1508 = vst [vmem:[#allocation11 + $0xe8] sm:$0xff] %v1460
    %1509 = vst [vmem:[#allocation11 + $0xf0] sm:$0xff] %v1461
    %1510 = vst [vmem:[#allocation11 + $0xf8] sm:$0xff] %v1462
    %1511 = vst [vmem:[#allocation11 + $0x100] sm:$0xff] %v1463
    %1512 = vst [vmem:[#allocation11 + $0x108] sm:$0xff] %v1464
    %1513 = vst [vmem:[#allocation11 + $0x110] sm:$0xff] %v1465
    %1514 = vst [vmem:[#allocation11 + $0x118] sm:$0xff] %v1466
    %1515 = vst [vmem:[#allocation11 + $0x120] sm:$0xff] %v1467
    %1516 = vst [vmem:[#allocation11 + $0x128] sm:$0xff] %v1468
    %1517 = vst [vmem:[#allocation11 + $0x130] sm:$0xff] %v1469
    %1518 = vst [vmem:[#allocation11 + $0x138] sm:$0xff] %v1470
    %1519 = vst [vmem:[#allocation11 + $0x140] sm:$0xff] %v1471
    %1520 = vst [vmem:[#allocation11 + $0x148] sm:$0xff] %v1472
    %1521 = vst [vmem:[#allocation11 + $0x150] sm:$0xff] %v1473
    %1522 = vst [vmem:[#allocation11 + $0x158] sm:$0xff] %v1474
    %1523 = vst [vmem:[#allocation11 + $0x160] sm:$0xff] %v1475
    %1524 = vst [vmem:[#allocation11 + $0x168] sm:$0xff] %v1476
    %1525 = vst [vmem:[#allocation11 + $0x170] sm:$0xff] %v1477
    %1526 = vst [vmem:[#allocation11 + $0x178] sm:$0xff] %v1478
    // Predicated region
    $region58: #{tpu_custom_call.1} parent=1 // pred_check
      _
    $region59: #{tpu_custom_call.1} parent=1 // pred_check_branch
      %1528 = sbr.rel (0) target = $region61
    $region60: #{tpu_custom_call.1} parent=1 // pred_region
      %s1530 = ssub.s32 6144, 6144
      %1531 = vsyncadd [#allocation4], %s1530
      %s1532 = sshll.u32 [#allocation11], 4
      %s1533 = int_to_ptr.vmem [resolvable:$true] %s1532
      %1538 = dma.vmem_to_hbm [thread:$0]  %s1533, 6144, %s9, [#allocation4], 128, 128, 8
    $region61: #{tpu_custom_call.1} parent=1 // pred_fallthru
      _
    // Predicated region
    $region62: #{tpu_custom_call.1} parent=1 // pred_check
      _
    $region63: #{tpu_custom_call.1} parent=1 // pred_check_branch
      %1540 = sbr.rel (0) target = $region65
    $region64: #{tpu_custom_call.1} parent=1 // pred_region
      %1541 = dma.done [#allocation4], 6144
    $region65: #{tpu_custom_call.1} parent=1 // pred_fallthru
      _
    %1542 = vsyncpa [#allocation3], 1
    %1543 = vsyncpa [#allocation6], 1
    %1544 = vsyncpa [#allocation9], 1
    %1545 = vsyncpa [#allocation4], 1

</llo_original>
